<compile_context>
chip_gen: v7x
topology: tpu7x:2x2x1
jax: 0.10.0
libtpu: 0.0.40
codegen_flags: <defaults>
</compile_context>

<pallas_src>
import functools
import math

import jax
import jax.numpy as jnp
from jax import lax
from jax.experimental import pallas as pl
from jax.experimental.pallas import tpu as pltpu

KSIZE = 7
PAD = KSIZE // 2
KK = KSIZE * KSIZE  # 49 taps per input map


# --------------------------------------------------------------------------
# Kernel 1: lane-dense channel SUM / MAX reduction (the HBM-bound hot loop).
# --------------------------------------------------------------------------
def _channel_reduce_kernel(x_ref, o_ref, acc_ref, *, csub):
    # x_ref   : (1, c_block, HW)  input channel chunk (HW on lanes)
    # o_ref   : (1, 2, HW) f32    [channel SUM, channel MAX], written at last step
    # acc_ref : (2, HW)    f32    running accumulators (VMEM scratch)
    c = pl.program_id(1)
    nc = pl.num_programs(1)
    c_block = x_ref.shape[1]
    hw = x_ref.shape[2]
    nsub = c_block // csub

    if nsub == 1:
        xi = x_ref[...]                                          # (1, c_block, HW)
        blk_sum = jnp.sum(xi.astype(jnp.float32), axis=1)        # (1, HW)
        blk_max = jnp.max(xi, axis=1).astype(jnp.float32)        # (1, HW)
    else:
        # Sub-chunked accumulation: keeps the f32 live-set at csub*HW even for
        # large bf16 blocks; max stays in the input dtype (exact for bf16).
        def body(i, carry):
            s, m = carry
            off = pl.multiple_of(i * csub, csub)
            xi = x_ref[:, pl.ds(off, csub), :]                   # (1, csub, HW)
            s = s + jnp.sum(xi.astype(jnp.float32), axis=1)
            m = jnp.maximum(m, jnp.max(xi, axis=1))
            return s, m

        blk_sum, blk_max = lax.fori_loop(
            0, nsub, body,
            (jnp.zeros((1, hw), jnp.float32),
             jnp.full((1, hw), -jnp.inf, x_ref.dtype)),
            unroll=min(nsub, 8))
        blk_max = blk_max.astype(jnp.float32)

    @pl.when(c == 0)
    def _():
        acc_ref[0:1, :] = blk_sum
        acc_ref[1:2, :] = blk_max

    @pl.when(c > 0)
    def _():
        acc_ref[0:1, :] = acc_ref[0:1, :] + blk_sum
        acc_ref[1:2, :] = jnp.maximum(acc_ref[1:2, :], blk_max)

    @pl.when(c == nc - 1)
    def _():
        o_ref[0] = acc_ref[...]


# --------------------------------------------------------------------------
# Kernel 2: tiny 7x7 conv(2->1, no bias) + sigmoid on the reduced maps.
# --------------------------------------------------------------------------
def _conv7x7_sigmoid_kernel(p_ref, w_ref, o_ref):
    # p_ref : (1, 2, Hp, Wp) f32  zero-padded [channel-sum, channel-max] maps
    # w_ref : (98,)          f32  SMEM flat taps; [0:49] avg taps * (1/C), [49:98] max taps
    # o_ref : (1, 1, H, W)   f32  sigmoid(conv)
    H = o_ref.shape[2]
    W = o_ref.shape[3]

    pm = p_ref[0]                     # (2, Hp, Wp)
    a_p = pm[0]
    m_p = pm[1]

    # Hoist the 7 lane-direction (kx) shifts out of the ky loop.
    a_cols = [a_p[:, kx:kx + W] for kx in range(KSIZE)]          # each (Hp, W)
    m_cols = [m_p[:, kx:kx + W] for kx in range(KSIZE)]

    # 4 independent accumulator chains to fill the VALU slots.
    accs = [jnp.zeros((H, W), jnp.float32) for _ in range(4)]
    t = 0
    for ky in range(KSIZE):
        row = ky * KSIZE
        wa = [w_ref[row + kx] for kx in range(KSIZE)]            # hoisted scalar taps
        wm = [w_ref[KK + row + kx] for kx in range(KSIZE)]
        for kx in range(KSIZE):
            accs[t & 3] = accs[t & 3] + wa[kx] * a_cols[kx][ky:ky + H, :]
            t += 1
            accs[t & 3] = accs[t & 3] + wm[kx] * m_cols[kx][ky:ky + H, :]
            t += 1
    acc = (accs[0] + accs[1]) + (accs[2] + accs[3])

    o_ref[0, 0] = jax.nn.sigmoid(acc).astype(o_ref.dtype)


# --------------------------------------------------------------------------
# Wrapper
# --------------------------------------------------------------------------
def _vmem_budget_bytes():
    """Generation-aware VMEM budget (v7x has 64 MiB/TC vs 128 MiB on v5e/v6e)."""
    try:
        vmem = getattr(pltpu.get_tpu_info(), "vmem_capacity_bytes",
                       64 * 1024 * 1024)
    except Exception:  # non-TPU / interpret / older runtime
        vmem = 64 * 1024 * 1024
    if vmem <= 64 * 1024 * 1024:
        return 40 * 1024 * 1024        # v7x: leave headroom in 64 MiB
    return 96 * 1024 * 1024            # v5e / v6e


def _pick_c_block(C, hw, itemsize, budget_bytes, max_c_block=None):
    """Largest channel block whose double-buffered input tile fits the budget."""
    # Half the budget for the (double-buffered) input blocks; the rest is
    # headroom for the resident output / accumulator and internal scratch.
    limit = max(1, (budget_bytes // 2) // (2 * hw * itemsize))
    if max_c_block is not None:
        limit = min(limit, max_c_block)
    if C <= limit:
        return C
    best = 0
    d = 8
    while d <= limit:
        if C % d == 0:
            best = d               # multiple-of-8 second-minor dim => tile aligned
        d += 8
    if best:
        return best
    # TODO(synk): channel counts that are not multiples of 8 and exceed the
    # budget would need a masked ragged last chunk; fall back to whole-C blocks.
    return C


@functools.partial(jax.jit,
                   static_argnames=("c_block", "csub", "vmem_limit_bytes"))
def _spatial_attention_impl(x, weight, *, c_block, csub, vmem_limit_bytes):
    N, C, H, W = x.shape
    hw = H * W
    ncb = C // c_block
    Hp, Wp = H + 2 * PAD, W + 2 * PAD

    # ---- Pass 1: channel sum / max, lane-dense (H*W on the lane axis) ----
    x3 = x.reshape(N, C, hw)   # free: NCHW is contiguous over (H, W)
    red = pl.pallas_call(
        functools.partial(_channel_reduce_kernel, csub=csub),
        out_shape=jax.ShapeDtypeStruct((N, 2, hw), jnp.float32),
        grid=(N, ncb),         # reduction (channel) axis last; MUST stay "arbitrary"
        in_specs=[pl.BlockSpec((1, c_block, hw), lambda n, c: (n, c, 0))],
        out_specs=pl.BlockSpec((1, 2, hw), lambda n, c: (n, 0, 0)),
        scratch_shapes=[pltpu.VMEM((2, hw), jnp.float32)],
        compiler_params=pltpu.CompilerParams(
            dimension_semantics=("parallel", "arbitrary"),
            vmem_limit_bytes=vmem_limit_bytes),
    )(x3)

    # ---- Pass 2: tiny 7x7 conv(2->1) + sigmoid on the reduced maps ----
    # Zero-pad only the reduced maps (2*H*W per image), never the full input.
    red_p = jnp.pad(red.reshape(N, 2, H, W),
                    ((0, 0), (0, 0), (PAD, PAD), (PAD, PAD)))
    # Flatten weight to (98,) for SMEM; fold 1/C into the avg taps so pass 1
    # only needs a channel SUM.
    w = weight.astype(jnp.float32).reshape(2, KK)
    w = w.at[0].multiply(1.0 / C).reshape(-1)

    out = pl.pallas_call(
        _conv7x7_sigmoid_kernel,
        out_shape=jax.ShapeDtypeStruct((N, 1, H, W), jnp.float32),
        grid=(N,),
        in_specs=[pl.BlockSpec((1, 2, Hp, Wp), lambda n: (n, 0, 0, 0)),
                  pl.BlockSpec(memory_space=pltpu.MemorySpace.SMEM)],
        out_specs=pl.BlockSpec((1, 1, H, W), lambda n: (n, 0, 0, 0)),
        compiler_params=pltpu.CompilerParams(
            dimension_semantics=("parallel",)),
    )(red_p, w)
    return out


def spatial_attention(x, weight, *, max_c_block=None):
    """x: (N, C, H, W), weight: (1, 2, 7, 7) -> sigmoid(conv([mean_c, max_c]))."""
    N, C, H, W = x.shape
    budget = _vmem_budget_bytes()
    c_block = _pick_c_block(C, H * W, x.dtype.itemsize, budget,
                            max_c_block=max_c_block)
    csub = 8 if (c_block % 8 == 0 and c_block > 8) else c_block
    return _spatial_attention_impl(x, weight, c_block=c_block, csub=csub,
                                   vmem_limit_bytes=budget)


def _reference(x, weight):
    """Pure-JAX reference mirroring the PyTorch forward."""
    avg = jnp.mean(x, axis=1, keepdims=True)
    mx = jnp.max(x, axis=1, keepdims=True)
    out = jnp.concatenate([avg, mx], axis=1)            # (N, 2, H, W)
    out = lax.conv_general_dilated(
        out, weight, window_strides=(1, 1),
        padding=((PAD, PAD), (PAD, PAD)),
        dimension_numbers=("NCHW", "OIHW", "NCHW"))
    return jax.nn.sigmoid(out)


if __name__ == "__main__":
    key = jax.random.PRNGKey(0)
    kx_, kw_, kx2_ = jax.random.split(key, 3)

    # Deterministic Conv2d(2, 1, 7, bias=False)-style weight init.
    fan_in = 2 * KSIZE * KSIZE
    bound = 1.0 / math.sqrt(fan_in)
    weight = jax.random.uniform(
        kw_, (1, 2, KSIZE, KSIZE), minval=-bound, maxval=bound,
        dtype=jnp.float32)

    # Case 1: small shape from the module spec (single channel grid step).
    N, C, H, W = 2, 4, 16, 16
    x = jax.random.normal(kx_, (N, C, H, W), dtype=jnp.float32)
    out = jax.block_until_ready(spatial_attention(x, weight))
    ref = _reference(x, weight)
    assert out.shape == (N, 1, H, W)
    assert jnp.allclose(out, ref, atol=1e-5, rtol=1e-5), float(
        jnp.max(jnp.abs(out - ref)))

    # Case 2: exercise the multi-step channel grid and the chunked in-kernel
    # accumulation (C=32, c_block=16, csub=8 -> 2 grid steps x 2 sub-chunks).
    C2 = 32
    x2 = jax.random.normal(kx2_, (N, C2, H, W), dtype=jnp.float32)
    out2 = jax.block_until_ready(spatial_attention(x2, weight, max_c_block=16))
    ref2 = _reference(x2, weight)
    assert out2.shape == (N, 1, H, W)
    assert jnp.allclose(out2, ref2, atol=1e-5, rtol=1e-5), float(
        jnp.max(jnp.abs(out2 - ref2)))

    print("KERNEL_OK")
</pallas_src>

<mosaic_0001>
module attributes {stable_mosaic.version = 11 : i64} {
  func.func @_channel_reduce_kernel(%arg0: i32, %arg1: i32, %arg2: memref<1x4x256xf32, #tpu.memory_space<vmem>>, %arg3: memref<1x2x256xf32, #tpu.memory_space<vmem>>, %arg4: memref<2x256xf32, #tpu.memory_space<vmem>>) attributes {dimension_semantics = [#tpu.dimension_semantics<parallel>, #tpu.dimension_semantics<arbitrary>], iteration_bounds = array<i64: 2, 1>, scalar_prefetch = 0 : i64, scratch_operands = 1 : i64, tpu.core_type = #tpu.core_type<tc>, window_params = [{transform_indices = @transform_0, window_bounds = array<i64: 1, 4, 256>}, {transform_indices = @transform_1, window_bounds = array<i64: 1, 2, 256>}]} {
    %c0 = arith.constant 0 : index
    %c0_0 = arith.constant 0 : index
    %c0_1 = arith.constant 0 : index
    %0 = vector.load %arg2[%c0, %c0_0, %c0_1] : memref<1x4x256xf32, #tpu.memory_space<vmem>>, vector<1x4x256xf32>
    %cst = arith.constant dense<0.000000e+00> : vector<1x256xf32>
    %1 = vector.multi_reduction <add>, %0, %cst [1] : vector<1x4x256xf32> to vector<1x256xf32>
    %cst_2 = arith.constant dense<0xFF800000> : vector<1x256xf32>
    %2 = vector.multi_reduction <maximumf>, %0, %cst_2 [1] : vector<1x4x256xf32> to vector<1x256xf32>
    %c0_i32 = arith.constant 0 : i32
    %3 = arith.cmpi eq, %arg1, %c0_i32 : i32
    %4 = arith.extui %3 : i1 to i32
    %c0_i32_3 = arith.constant 0 : i32
    %5 = arith.cmpi ne, %4, %c0_i32_3 : i32
    scf.if %5 {
      %c0_8 = arith.constant 0 : index
      %c0_9 = arith.constant 0 : index
      %12 = vector.load %arg4[%c0_8, %c0_9] : memref<2x256xf32, #tpu.memory_space<vmem>>, vector<1x256xf32>
      tpu.vector_store %arg4[%c0_8, %c0_9], %1 {strides = array<i32>} : memref<2x256xf32, #tpu.memory_space<vmem>>, vector<1x256xf32>,
      %c1 = arith.constant 1 : index
      %c0_10 = arith.constant 0 : index
      %13 = vector.load %arg4[%c1, %c0_10] : memref<2x256xf32, #tpu.memory_space<vmem>>, vector<1x256xf32>
      tpu.vector_store %arg4[%c1, %c0_10], %2 {strides = array<i32>} : memref<2x256xf32, #tpu.memory_space<vmem>>, vector<1x256xf32>,
    } else {
    }
    %c0_i32_4 = arith.constant 0 : i32
    %6 = arith.cmpi sgt, %arg1, %c0_i32_4 : i32
    %7 = arith.extui %6 : i1 to i32
    %c0_i32_5 = arith.constant 0 : i32
    %8 = arith.cmpi ne, %7, %c0_i32_5 : i32
    scf.if %8 {
      %c0_8 = arith.constant 0 : index
      %c0_9 = arith.constant 0 : index
      %12 = vector.load %arg4[%c0_8, %c0_9] : memref<2x256xf32, #tpu.memory_space<vmem>>, vector<1x256xf32>
      %13 = arith.addf %12, %1 : vector<1x256xf32>
      %c0_10 = arith.constant 0 : index
      %c0_11 = arith.constant 0 : index
      %14 = vector.load %arg4[%c0_10, %c0_11] : memref<2x256xf32, #tpu.memory_space<vmem>>, vector<1x256xf32>
      tpu.vector_store %arg4[%c0_10, %c0_11], %13 {strides = array<i32>} : memref<2x256xf32, #tpu.memory_space<vmem>>, vector<1x256xf32>,
      %c1 = arith.constant 1 : index
      %c0_12 = arith.constant 0 : index
      %15 = vector.load %arg4[%c1, %c0_12] : memref<2x256xf32, #tpu.memory_space<vmem>>, vector<1x256xf32>
      %16 = arith.maximumf %15, %2 : vector<1x256xf32>
      %c1_13 = arith.constant 1 : index
      %c0_14 = arith.constant 0 : index
      %17 = vector.load %arg4[%c1_13, %c0_14] : memref<2x256xf32, #tpu.memory_space<vmem>>, vector<1x256xf32>
      tpu.vector_store %arg4[%c1_13, %c0_14], %16 {strides = array<i32>} : memref<2x256xf32, #tpu.memory_space<vmem>>, vector<1x256xf32>,
    } else {
    }
    %c0_i32_6 = arith.constant 0 : i32
    %9 = arith.cmpi eq, %arg1, %c0_i32_6 : i32
    %10 = arith.extui %9 : i1 to i32
    %c0_i32_7 = arith.constant 0 : i32
    %11 = arith.cmpi ne, %10, %c0_i32_7 : i32
    scf.if %11 {
      %c0_8 = arith.constant 0 : index
      %c0_9 = arith.constant 0 : index
      %12 = vector.load %arg4[%c0_8, %c0_9] : memref<2x256xf32, #tpu.memory_space<vmem>>, vector<2x256xf32>
      %c0_10 = arith.constant 0 : index
      %c0_11 = arith.constant 0 : index
      %c0_12 = arith.constant 0 : index
      %13 = vector.load %arg3[%c0_10, %c0_11, %c0_12] : memref<1x2x256xf32, #tpu.memory_space<vmem>>, vector<1x2x256xf32>
      %14 = vector.shape_cast %13 : vector<1x2x256xf32> to vector<2x256xf32>
      %15 = vector.shape_cast %12 : vector<2x256xf32> to vector<1x2x256xf32>
      tpu.vector_store %arg3[%c0_10, %c0_11, %c0_12], %15 {strides = array<i32>} : memref<1x2x256xf32, #tpu.memory_space<vmem>>, vector<1x2x256xf32>,
    } else {
    }
    return
  }
  func.func @transform_0(%arg0: i32, %arg1: i32) -> (i32, i32, i32) {
    %c0_i32 = arith.constant 0 : i32
    %c0_i32_0 = arith.constant 0 : i32
    return %arg0, %arg1, %c0_i32 : i32, i32, i32
  }
  func.func @transform_1(%arg0: i32, %arg1: i32) -> (i32, i32, i32) {
    %c0_i32 = arith.constant 0 : i32
    %c0_i32_0 = arith.constant 0 : i32
    %c0_i32_1 = arith.constant 0 : i32
    return %arg0, %c0_i32, %c0_i32_0 : i32, i32, i32
  }
}

module attributes {stable_mosaic.version = 11 : i64} {
  func.func @_conv7x7_sigmoid_kernel(%arg0: i32, %arg1: memref<1x2x22x22xf32, #tpu.memory_space<vmem>>, %arg2: memref<98xf32, #tpu.memory_space<smem>>, %arg3: memref<1x1x16x16xf32, #tpu.memory_space<vmem>>) attributes {dimension_semantics = [#tpu.dimension_semantics<parallel>], iteration_bounds = array<i64: 2>, scalar_prefetch = 0 : i64, scratch_operands = 0 : i64, tpu.core_type = #tpu.core_type<tc>, window_params = [{transform_indices = @transform_0, window_bounds = array<i64: 1, 2, 22, 22>}, {transform_indices = @transform_1, window_bounds = array<i64: 98>}, {transform_indices = @transform_2, window_bounds = array<i64: 1, 1, 16, 16>}]} {
    %c0 = arith.constant 0 : index
    %c0_0 = arith.constant 0 : index
    %c0_1 = arith.constant 0 : index
    %c0_2 = arith.constant 0 : index
    %0 = vector.load %arg1[%c0, %c0_0, %c0_1, %c0_2] : memref<1x2x22x22xf32, #tpu.memory_space<vmem>>, vector<1x2x22x22xf32>
    %1 = vector.shape_cast %0 : vector<1x2x22x22xf32> to vector<2x22x22xf32>
    %2 = vector.extract_strided_slice %1 {offsets = [0, 0, 0], sizes = [1, 22, 22], strides = [1, 1, 1]} : vector<2x22x22xf32> to vector<1x22x22xf32>
    %3 = vector.shape_cast %2 : vector<1x22x22xf32> to vector<22x22xf32>
    %4 = vector.extract_strided_slice %1 {offsets = [1, 0, 0], sizes = [1, 22, 22], strides = [1, 1, 1]} : vector<2x22x22xf32> to vector<1x22x22xf32>
    %5 = vector.shape_cast %4 : vector<1x22x22xf32> to vector<22x22xf32>
    %6 = vector.extract_strided_slice %3 {offsets = [0, 0], sizes = [22, 16], strides = [1, 1]} : vector<22x22xf32> to vector<22x16xf32>
    %7 = vector.extract_strided_slice %3 {offsets = [0, 1], sizes = [22, 16], strides = [1, 1]} : vector<22x22xf32> to vector<22x16xf32>
    %8 = vector.extract_strided_slice %3 {offsets = [0, 2], sizes = [22, 16], strides = [1, 1]} : vector<22x22xf32> to vector<22x16xf32>
    %9 = vector.extract_strided_slice %3 {offsets = [0, 3], sizes = [22, 16], strides = [1, 1]} : vector<22x22xf32> to vector<22x16xf32>
    %10 = vector.extract_strided_slice %3 {offsets = [0, 4], sizes = [22, 16], strides = [1, 1]} : vector<22x22xf32> to vector<22x16xf32>
    %11 = vector.extract_strided_slice %3 {offsets = [0, 5], sizes = [22, 16], strides = [1, 1]} : vector<22x22xf32> to vector<22x16xf32>
    %12 = vector.extract_strided_slice %3 {offsets = [0, 6], sizes = [22, 16], strides = [1, 1]} : vector<22x22xf32> to vector<22x16xf32>
    %13 = vector.extract_strided_slice %5 {offsets = [0, 0], sizes = [22, 16], strides = [1, 1]} : vector<22x22xf32> to vector<22x16xf32>
    %14 = vector.extract_strided_slice %5 {offsets = [0, 1], sizes = [22, 16], strides = [1, 1]} : vector<22x22xf32> to vector<22x16xf32>
    %15 = vector.extract_strided_slice %5 {offsets = [0, 2], sizes = [22, 16], strides = [1, 1]} : vector<22x22xf32> to vector<22x16xf32>
    %16 = vector.extract_strided_slice %5 {offsets = [0, 3], sizes = [22, 16], strides = [1, 1]} : vector<22x22xf32> to vector<22x16xf32>
    %17 = vector.extract_strided_slice %5 {offsets = [0, 4], sizes = [22, 16], strides = [1, 1]} : vector<22x22xf32> to vector<22x16xf32>
    %18 = vector.extract_strided_slice %5 {offsets = [0, 5], sizes = [22, 16], strides = [1, 1]} : vector<22x22xf32> to vector<22x16xf32>
    %19 = vector.extract_strided_slice %5 {offsets = [0, 6], sizes = [22, 16], strides = [1, 1]} : vector<22x22xf32> to vector<22x16xf32>
    %cst = arith.constant 0.000000e+00 : f32
    %20 = vector.broadcast %cst : f32 to vector<16x16xf32>
    %cst_3 = arith.constant 0.000000e+00 : f32
    %21 = vector.broadcast %cst_3 : f32 to vector<16x16xf32>
    %cst_4 = arith.constant 0.000000e+00 : f32
    %22 = vector.broadcast %cst_4 : f32 to vector<16x16xf32>
    %cst_5 = arith.constant 0.000000e+00 : f32
    %23 = vector.broadcast %cst_5 : f32 to vector<16x16xf32>
    %c0_6 = arith.constant 0 : index
    %24 = memref.load %arg2[%c0_6] : memref<98xf32, #tpu.memory_space<smem>>
    %c1 = arith.constant 1 : index
    %25 = memref.load %arg2[%c1] : memref<98xf32, #tpu.memory_space<smem>>
    %c2 = arith.constant 2 : index
    %26 = memref.load %arg2[%c2] : memref<98xf32, #tpu.memory_space<smem>>
    %c3 = arith.constant 3 : index
    %27 = memref.load %arg2[%c3] : memref<98xf32, #tpu.memory_space<smem>>
    %c4 = arith.constant 4 : index
    %28 = memref.load %arg2[%c4] : memref<98xf32, #tpu.memory_space<smem>>
    %c5 = arith.constant 5 : index
    %29 = memref.load %arg2[%c5] : memref<98xf32, #tpu.memory_space<smem>>
    %c6 = arith.constant 6 : index
    %30 = memref.load %arg2[%c6] : memref<98xf32, #tpu.memory_space<smem>>
    %c49 = arith.constant 49 : index
    %31 = memref.load %arg2[%c49] : memref<98xf32, #tpu.memory_space<smem>>
    %c50 = arith.constant 50 : index
    %32 = memref.load %arg2[%c50] : memref<98xf32, #tpu.memory_space<smem>>
    %c51 = arith.constant 51 : index
    %33 = memref.load %arg2[%c51] : memref<98xf32, #tpu.memory_space<smem>>
    %c52 = arith.constant 52 : index
    %34 = memref.load %arg2[%c52] : memref<98xf32, #tpu.memory_space<smem>>
    %c53 = arith.constant 53 : index
    %35 = memref.load %arg2[%c53] : memref<98xf32, #tpu.memory_space<smem>>
    %c54 = arith.constant 54 : index
    %36 = memref.load %arg2[%c54] : memref<98xf32, #tpu.memory_space<smem>>
    %c55 = arith.constant 55 : index
    %37 = memref.load %arg2[%c55] : memref<98xf32, #tpu.memory_space<smem>>
    %38 = vector.extract_strided_slice %6 {offsets = [0, 0], sizes = [16, 16], strides = [1, 1]} : vector<22x16xf32> to vector<16x16xf32>
    %39 = vector.broadcast %24 : f32 to vector<16x16xf32>
    %40 = arith.mulf %39, %38 : vector<16x16xf32>
    %41 = arith.addf %20, %40 : vector<16x16xf32>
    %42 = vector.extract_strided_slice %13 {offsets = [0, 0], sizes = [16, 16], strides = [1, 1]} : vector<22x16xf32> to vector<16x16xf32>
    %43 = vector.broadcast %31 : f32 to vector<16x16xf32>
    %44 = arith.mulf %43, %42 : vector<16x16xf32>
    %45 = arith.addf %21, %44 : vector<16x16xf32>
    %46 = vector.extract_strided_slice %7 {offsets = [0, 0], sizes = [16, 16], strides = [1, 1]} : vector<22x16xf32> to vector<16x16xf32>
    %47 = vector.broadcast %25 : f32 to vector<16x16xf32>
    %48 = arith.mulf %47, %46 : vector<16x16xf32>
    %49 = arith.addf %22, %48 : vector<16x16xf32>
    %50 = vector.extract_strided_slice %14 {offsets = [0, 0], sizes = [16, 16], strides = [1, 1]} : vector<22x16xf32> to vector<16x16xf32>
    %51 = vector.broadcast %32 : f32 to vector<16x16xf32>
    %52 = arith.mulf %51, %50 : vector<16x16xf32>
    %53 = arith.addf %23, %52 : vector<16x16xf32>
    %54 = vector.extract_strided_slice %8 {offsets = [0, 0], sizes = [16, 16], strides = [1, 1]} : vector<22x16xf32> to vector<16x16xf32>
    %55 = vector.broadcast %26 : f32 to vector<16x16xf32>
    %56 = arith.mulf %55, %54 : vector<16x16xf32>
    %57 = arith.addf %41, %56 : vector<16x16xf32>
    %58 = vector.extract_strided_slice %15 {offsets = [0, 0], sizes = [16, 16], strides = [1, 1]} : vector<22x16xf32> to vector<16x16xf32>
    %59 = vector.broadcast %33 : f32 to vector<16x16xf32>
    %60 = arith.mulf %59, %58 : vector<16x16xf32>
    %61 = arith.addf %45, %60 : vector<16x16xf32>
    %62 = vector.extract_strided_slice %9 {offsets = [0, 0], sizes = [16, 16], strides = [1, 1]} : vector<22x16xf32> to vector<16x16xf32>
    %63 = vector.broadcast %27 : f32 to vector<16x16xf32>
    %64 = arith.mulf %63, %62 : vector<16x16xf32>
    %65 = arith.addf %49, %64 : vector<16x16xf32>
    %66 = vector.extract_strided_slice %16 {offsets = [0, 0], sizes = [16, 16], strides = [1, 1]} : vector<22x16xf32> to vector<16x16xf32>
    %67 = vector.broadcast %34 : f32 to vector<16x16xf32>
    %68 = arith.mulf %67, %66 : vector<16x16xf32>
    %69 = arith.addf %53, %68 : vector<16x16xf32>
    %70 = vector.extract_strided_slice %10 {offsets = [0, 0], sizes = [16, 16], strides = [1, 1]} : vector<22x16xf32> to vector<16x16xf32>
    %71 = vector.broadcast %28 : f32 to vector<16x16xf32>
    %72 = arith.mulf %71, %70 : vector<16x16xf32>
    %73 = arith.addf %57, %72 : vector<16x16xf32>
    %74 = vector.extract_strided_slice %17 {offsets = [0, 0], sizes = [16, 16], strides = [1, 1]} : vector<22x16xf32> to vector<16x16xf32>
    %75 = vector.broadcast %35 : f32 to vector<16x16xf32>
    %76 = arith.mulf %75, %74 : vector<16x16xf32>
    %77 = arith.addf %61, %76 : vector<16x16xf32>
    %78 = vector.extract_strided_slice %11 {offsets = [0, 0], sizes = [16, 16], strides = [1, 1]} : vector<22x16xf32> to vector<16x16xf32>
    %79 = vector.broadcast %29 : f32 to vector<16x16xf32>
    %80 = arith.mulf %79, %78 : vector<16x16xf32>
    %81 = arith.addf %65, %80 : vector<16x16xf32>
    %82 = vector.extract_strided_slice %18 {offsets = [0, 0], sizes = [16, 16], strides = [1, 1]} : vector<22x16xf32> to vector<16x16xf32>
    %83 = vector.broadcast %36 : f32 to vector<16x16xf32>
    %84 = arith.mulf %83, %82 : vector<16x16xf32>
    %85 = arith.addf %69, %84 : vector<16x16xf32>
    %86 = vector.extract_strided_slice %12 {offsets = [0, 0], sizes = [16, 16], strides = [1, 1]} : vector<22x16xf32> to vector<16x16xf32>
    %87 = vector.broadcast %30 : f32 to vector<16x16xf32>
    %88 = arith.mulf %87, %86 : vector<16x16xf32>
    %89 = arith.addf %73, %88 : vector<16x16xf32>
    %90 = vector.extract_strided_slice %19 {offsets = [0, 0], sizes = [16, 16], strides = [1, 1]} : vector<22x16xf32> to vector<16x16xf32>
    %91 = vector.broadcast %37 : f32 to vector<16x16xf32>
    %92 = arith.mulf %91, %90 : vector<16x16xf32>
    %93 = arith.addf %77, %92 : vector<16x16xf32>
    %c7 = arith.constant 7 : index
    %94 = memref.load %arg2[%c7] : memref<98xf32, #tpu.memory_space<smem>>
    %c8 = arith.constant 8 : index
    %95 = memref.load %arg2[%c8] : memref<98xf32, #tpu.memory_space<smem>>
    %c9 = arith.constant 9 : index
    %96 = memref.load %arg2[%c9] : memref<98xf32, #tpu.memory_space<smem>>
    %c10 = arith.constant 10 : index
    %97 = memref.load %arg2[%c10] : memref<98xf32, #tpu.memory_space<smem>>
    %c11 = arith.constant 11 : index
    %98 = memref.load %arg2[%c11] : memref<98xf32, #tpu.memory_space<smem>>
    %c12 = arith.constant 12 : index
    %99 = memref.load %arg2[%c12] : memref<98xf32, #tpu.memory_space<smem>>
    %c13 = arith.constant 13 : index
    %100 = memref.load %arg2[%c13] : memref<98xf32, #tpu.memory_space<smem>>
    %c56 = arith.constant 56 : index
    %101 = memref.load %arg2[%c56] : memref<98xf32, #tpu.memory_space<smem>>
    %c57 = arith.constant 57 : index
    %102 = memref.load %arg2[%c57] : memref<98xf32, #tpu.memory_space<smem>>
    %c58 = arith.constant 58 : index
    %103 = memref.load %arg2[%c58] : memref<98xf32, #tpu.memory_space<smem>>
    %c59 = arith.constant 59 : index
    %104 = memref.load %arg2[%c59] : memref<98xf32, #tpu.memory_space<smem>>
    %c60 = arith.constant 60 : index
    %105 = memref.load %arg2[%c60] : memref<98xf32, #tpu.memory_space<smem>>
    %c61 = arith.constant 61 : index
    %106 = memref.load %arg2[%c61] : memref<98xf32, #tpu.memory_space<smem>>
    %c62 = arith.constant 62 : index
    %107 = memref.load %arg2[%c62] : memref<98xf32, #tpu.memory_space<smem>>
    %108 = vector.extract_strided_slice %6 {offsets = [1, 0], sizes = [16, 16], strides = [1, 1]} : vector<22x16xf32> to vector<16x16xf32>
    %109 = vector.broadcast %94 : f32 to vector<16x16xf32>
    %110 = arith.mulf %109, %108 : vector<16x16xf32>
    %111 = arith.addf %81, %110 : vector<16x16xf32>
    %112 = vector.extract_strided_slice %13 {offsets = [1, 0], sizes = [16, 16], strides = [1, 1]} : vector<22x16xf32> to vector<16x16xf32>
    %113 = vector.broadcast %101 : f32 to vector<16x16xf32>
    %114 = arith.mulf %113, %112 : vector<16x16xf32>
    %115 = arith.addf %85, %114 : vector<16x16xf32>
    %116 = vector.extract_strided_slice %7 {offsets = [1, 0], sizes = [16, 16], strides = [1, 1]} : vector<22x16xf32> to vector<16x16xf32>
    %117 = vector.broadcast %95 : f32 to vector<16x16xf32>
    %118 = arith.mulf %117, %116 : vector<16x16xf32>
    %119 = arith.addf %89, %118 : vector<16x16xf32>
    %120 = vector.extract_strided_slice %14 {offsets = [1, 0], sizes = [16, 16], strides = [1, 1]} : vector<22x16xf32> to vector<16x16xf32>
    %121 = vector.broadcast %102 : f32 to vector<16x16xf32>
    %122 = arith.mulf %121, %120 : vector<16x16xf32>
    %123 = arith.addf %93, %122 : vector<16x16xf32>
    %124 = vector.extract_strided_slice %8 {offsets = [1, 0], sizes = [16, 16], strides = [1, 1]} : vector<22x16xf32> to vector<16x16xf32>
    %125 = vector.broadcast %96 : f32 to vector<16x16xf32>
    %126 = arith.mulf %125, %124 : vector<16x16xf32>
    %127 = arith.addf %111, %126 : vector<16x16xf32>
    %128 = vector.extract_strided_slice %15 {offsets = [1, 0], sizes = [16, 16], strides = [1, 1]} : vector<22x16xf32> to vector<16x16xf32>
    %129 = vector.broadcast %103 : f32 to vector<16x16xf32>
    %130 = arith.mulf %129, %128 : vector<16x16xf32>
    %131 = arith.addf %115, %130 : vector<16x16xf32>
    %132 = vector.extract_strided_slice %9 {offsets = [1, 0], sizes = [16, 16], strides = [1, 1]} : vector<22x16xf32> to vector<16x16xf32>
    %133 = vector.broadcast %97 : f32 to vector<16x16xf32>
    %134 = arith.mulf %133, %132 : vector<16x16xf32>
    %135 = arith.addf %119, %134 : vector<16x16xf32>
    %136 = vector.extract_strided_slice %16 {offsets = [1, 0], sizes = [16, 16], strides = [1, 1]} : vector<22x16xf32> to vector<16x16xf32>
    %137 = vector.broadcast %104 : f32 to vector<16x16xf32>
    %138 = arith.mulf %137, %136 : vector<16x16xf32>
    %139 = arith.addf %123, %138 : vector<16x16xf32>
    %140 = vector.extract_strided_slice %10 {offsets = [1, 0], sizes = [16, 16], strides = [1, 1]} : vector<22x16xf32> to vector<16x16xf32>
    %141 = vector.broadcast %98 : f32 to vector<16x16xf32>
    %142 = arith.mulf %141, %140 : vector<16x16xf32>
    %143 = arith.addf %127, %142 : vector<16x16xf32>
    %144 = vector.extract_strided_slice %17 {offsets = [1, 0], sizes = [16, 16], strides = [1, 1]} : vector<22x16xf32> to vector<16x16xf32>
    %145 = vector.broadcast %105 : f32 to vector<16x16xf32>
    %146 = arith.mulf %145, %144 : vector<16x16xf32>
    %147 = arith.addf %131, %146 : vector<16x16xf32>
    %148 = vector.extract_strided_slice %11 {offsets = [1, 0], sizes = [16, 16], strides = [1, 1]} : vector<22x16xf32> to vector<16x16xf32>
    %149 = vector.broadcast %99 : f32 to vector<16x16xf32>
    %150 = arith.mulf %149, %148 : vector<16x16xf32>
    %151 = arith.addf %135, %150 : vector<16x16xf32>
    %152 = vector.extract_strided_slice %18 {offsets = [1, 0], sizes = [16, 16], strides = [1, 1]} : vector<22x16xf32> to vector<16x16xf32>
    %153 = vector.broadcast %106 : f32 to vector<16x16xf32>
    %154 = arith.mulf %153, %152 : vector<16x16xf32>
    %155 = arith.addf %139, %154 : vector<16x16xf32>
    %156 = vector.extract_strided_slice %12 {offsets = [1, 0], sizes = [16, 16], strides = [1, 1]} : vector<22x16xf32> to vector<16x16xf32>
    %157 = vector.broadcast %100 : f32 to vector<16x16xf32>
    %158 = arith.mulf %157, %156 : vector<16x16xf32>
    %159 = arith.addf %143, %158 : vector<16x16xf32>
    %160 = vector.extract_strided_slice %19 {offsets = [1, 0], sizes = [16, 16], strides = [1, 1]} : vector<22x16xf32> to vector<16x16xf32>
    %161 = vector.broadcast %107 : f32 to vector<16x16xf32>
    %162 = arith.mulf %161, %160 : vector<16x16xf32>
    %163 = arith.addf %147, %162 : vector<16x16xf32>
    %c14 = arith.constant 14 : index
    %164 = memref.load %arg2[%c14] : memref<98xf32, #tpu.memory_space<smem>>
    %c15 = arith.constant 15 : index
    %165 = memref.load %arg2[%c15] : memref<98xf32, #tpu.memory_space<smem>>
    %c16 = arith.constant 16 : index
    %166 = memref.load %arg2[%c16] : memref<98xf32, #tpu.memory_space<smem>>
    %c17 = arith.constant 17 : index
    %167 = memref.load %arg2[%c17] : memref<98xf32, #tpu.memory_space<smem>>
    %c18 = arith.constant 18 : index
    %168 = memref.load %arg2[%c18] : memref<98xf32, #tpu.memory_space<smem>>
    %c19 = arith.constant 19 : index
    %169 = memref.load %arg2[%c19] : memref<98xf32, #tpu.memory_space<smem>>
    %c20 = arith.constant 20 : index
    %170 = memref.load %arg2[%c20] : memref<98xf32, #tpu.memory_space<smem>>
    %c63 = arith.constant 63 : index
    %171 = memref.load %arg2[%c63] : memref<98xf32, #tpu.memory_space<smem>>
    %c64 = arith.constant 64 : index
    %172 = memref.load %arg2[%c64] : memref<98xf32, #tpu.memory_space<smem>>
    %c65 = arith.constant 65 : index
    %173 = memref.load %arg2[%c65] : memref<98xf32, #tpu.memory_space<smem>>
    %c66 = arith.constant 66 : index
    %174 = memref.load %arg2[%c66] : memref<98xf32, #tpu.memory_space<smem>>
    %c67 = arith.constant 67 : index
    %175 = memref.load %arg2[%c67] : memref<98xf32, #tpu.memory_space<smem>>
    %c68 = arith.constant 68 : index
    %176 = memref.load %arg2[%c68] : memref<98xf32, #tpu.memory_space<smem>>
    %c69 = arith.constant 69 : index
    %177 = memref.load %arg2[%c69] : memref<98xf32, #tpu.memory_space<smem>>
    %178 = vector.extract_strided_slice %6 {offsets = [2, 0], sizes = [16, 16], strides = [1, 1]} : vector<22x16xf32> to vector<16x16xf32>
    %179 = vector.broadcast %164 : f32 to vector<16x16xf32>
    %180 = arith.mulf %179, %178 : vector<16x16xf32>
    %181 = arith.addf %151, %180 : vector<16x16xf32>
    %182 = vector.extract_strided_slice %13 {offsets = [2, 0], sizes = [16, 16], strides = [1, 1]} : vector<22x16xf32> to vector<16x16xf32>
    %183 = vector.broadcast %171 : f32 to vector<16x16xf32>
    %184 = arith.mulf %183, %182 : vector<16x16xf32>
    %185 = arith.addf %155, %184 : vector<16x16xf32>
    %186 = vector.extract_strided_slice %7 {offsets = [2, 0], sizes = [16, 16], strides = [1, 1]} : vector<22x16xf32> to vector<16x16xf32>
    %187 = vector.broadcast %165 : f32 to vector<16x16xf32>
    %188 = arith.mulf %187, %186 : vector<16x16xf32>
    %189 = arith.addf %159, %188 : vector<16x16xf32>
    %190 = vector.extract_strided_slice %14 {offsets = [2, 0], sizes = [16, 16], strides = [1, 1]} : vector<22x16xf32> to vector<16x16xf32>
    %191 = vector.broadcast %172 : f32 to vector<16x16xf32>
    %192 = arith.mulf %191, %190 : vector<16x16xf32>
    %193 = arith.addf %163, %192 : vector<16x16xf32>
    %194 = vector.extract_strided_slice %8 {offsets = [2, 0], sizes = [16, 16], strides = [1, 1]} : vector<22x16xf32> to vector<16x16xf32>
    %195 = vector.broadcast %166 : f32 to vector<16x16xf32>
    %196 = arith.mulf %195, %194 : vector<16x16xf32>
    %197 = arith.addf %181, %196 : vector<16x16xf32>
    %198 = vector.extract_strided_slice %15 {offsets = [2, 0], sizes = [16, 16], strides = [1, 1]} : vector<22x16xf32> to vector<16x16xf32>
    %199 = vector.broadcast %173 : f32 to vector<16x16xf32>
    %200 = arith.mulf %199, %198 : vector<16x16xf32>
    %201 = arith.addf %185, %200 : vector<16x16xf32>
    %202 = vector.extract_strided_slice %9 {offsets = [2, 0], sizes = [16, 16], strides = [1, 1]} : vector<22x16xf32> to vector<16x16xf32>
    %203 = vector.broadcast %167 : f32 to vector<16x16xf32>
    %204 = arith.mulf %203, %202 : vector<16x16xf32>
    %205 = arith.addf %189, %204 : vector<16x16xf32>
    %206 = vector.extract_strided_slice %16 {offsets = [2, 0], sizes = [16, 16], strides = [1, 1]} : vector<22x16xf32> to vector<16x16xf32>
    %207 = vector.broadcast %174 : f32 to vector<16x16xf32>
    %208 = arith.mulf %207, %206 : vector<16x16xf32>
    %209 = arith.addf %193, %208 : vector<16x16xf32>
    %210 = vector.extract_strided_slice %10 {offsets = [2, 0], sizes = [16, 16], strides = [1, 1]} : vector<22x16xf32> to vector<16x16xf32>
    %211 = vector.broadcast %168 : f32 to vector<16x16xf32>
    %212 = arith.mulf %211, %210 : vector<16x16xf32>
    %213 = arith.addf %197, %212 : vector<16x16xf32>
    %214 = vector.extract_strided_slice %17 {offsets = [2, 0], sizes = [16, 16], strides = [1, 1]} : vector<22x16xf32> to vector<16x16xf32>
    %215 = vector.broadcast %175 : f32 to vector<16x16xf32>
    %216 = arith.mulf %215, %214 : vector<16x16xf32>
    %217 = arith.addf %201, %216 : vector<16x16xf32>
    %218 = vector.extract_strided_slice %11 {offsets = [2, 0], sizes = [16, 16], strides = [1, 1]} : vector<22x16xf32> to vector<16x16xf32>
    %219 = vector.broadcast %169 : f32 to vector<16x16xf32>
    %220 = arith.mulf %219, %218 : vector<16x16xf32>
    %221 = arith.addf %205, %220 : vector<16x16xf32>
    %222 = vector.extract_strided_slice %18 {offsets = [2, 0], sizes = [16, 16], strides = [1, 1]} : vector<22x16xf32> to vector<16x16xf32>
    %223 = vector.broadcast %176 : f32 to vector<16x16xf32>
    %224 = arith.mulf %223, %222 : vector<16x16xf32>
    %225 = arith.addf %209, %224 : vector<16x16xf32>
    %226 = vector.extract_strided_slice %12 {offsets = [2, 0], sizes = [16, 16], strides = [1, 1]} : vector<22x16xf32> to vector<16x16xf32>
    %227 = vector.broadcast %170 : f32 to vector<16x16xf32>
    %228 = arith.mulf %227, %226 : vector<16x16xf32>
    %229 = arith.addf %213, %228 : vector<16x16xf32>
    %230 = vector.extract_strided_slice %19 {offsets = [2, 0], sizes = [16, 16], strides = [1, 1]} : vector<22x16xf32> to vector<16x16xf32>
    %231 = vector.broadcast %177 : f32 to vector<16x16xf32>
    %232 = arith.mulf %231, %230 : vector<16x16xf32>
    %233 = arith.addf %217, %232 : vector<16x16xf32>
    %c21 = arith.constant 21 : index
    %234 = memref.load %arg2[%c21] : memref<98xf32, #tpu.memory_space<smem>>
    %c22 = arith.constant 22 : index
    %235 = memref.load %arg2[%c22] : memref<98xf32, #tpu.memory_space<smem>>
    %c23 = arith.constant 23 : index
    %236 = memref.load %arg2[%c23] : memref<98xf32, #tpu.memory_space<smem>>
    %c24 = arith.constant 24 : index
    %237 = memref.load %arg2[%c24] : memref<98xf32, #tpu.memory_space<smem>>
    %c25 = arith.constant 25 : index
    %238 = memref.load %arg2[%c25] : memref<98xf32, #tpu.memory_space<smem>>
    %c26 = arith.constant 26 : index
    %239 = memref.load %arg2[%c26] : memref<98xf32, #tpu.memory_space<smem>>
    %c27 = arith.constant 27 : index
    %240 = memref.load %arg2[%c27] : memref<98xf32, #tpu.memory_space<smem>>
    %c70 = arith.constant 70 : index
    %241 = memref.load %arg2[%c70] : memref<98xf32, #tpu.memory_space<smem>>
    %c71 = arith.constant 71 : index
    %242 = memref.load %arg2[%c71] : memref<98xf32, #tpu.memory_space<smem>>
    %c72 = arith.constant 72 : index
    %243 = memref.load %arg2[%c72] : memref<98xf32, #tpu.memory_space<smem>>
    %c73 = arith.constant 73 : index
    %244 = memref.load %arg2[%c73] : memref<98xf32, #tpu.memory_space<smem>>
    %c74 = arith.constant 74 : index
    %245 = memref.load %arg2[%c74] : memref<98xf32, #tpu.memory_space<smem>>
    %c75 = arith.constant 75 : index
    %246 = memref.load %arg2[%c75] : memref<98xf32, #tpu.memory_space<smem>>
    %c76 = arith.constant 76 : index
    %247 = memref.load %arg2[%c76] : memref<98xf32, #tpu.memory_space<smem>>
    %248 = vector.extract_strided_slice %6 {offsets = [3, 0], sizes = [16, 16], strides = [1, 1]} : vector<22x16xf32> to vector<16x16xf32>
    %249 = vector.broadcast %234 : f32 to vector<16x16xf32>
    %250 = arith.mulf %249, %248 : vector<16x16xf32>
    %251 = arith.addf %221, %250 : vector<16x16xf32>
    %252 = vector.extract_strided_slice %13 {offsets = [3, 0], sizes = [16, 16], strides = [1, 1]} : vector<22x16xf32> to vector<16x16xf32>
    %253 = vector.broadcast %241 : f32 to vector<16x16xf32>
    %254 = arith.mulf %253, %252 : vector<16x16xf32>
    %255 = arith.addf %225, %254 : vector<16x16xf32>
    %256 = vector.extract_strided_slice %7 {offsets = [3, 0], sizes = [16, 16], strides = [1, 1]} : vector<22x16xf32> to vector<16x16xf32>
    %257 = vector.broadcast %235 : f32 to vector<16x16xf32>
    %258 = arith.mulf %257, %256 : vector<16x16xf32>
    %259 = arith.addf %229, %258 : vector<16x16xf32>
    %260 = vector.extract_strided_slice %14 {offsets = [3, 0], sizes = [16, 16], strides = [1, 1]} : vector<22x16xf32> to vector<16x16xf32>
    %261 = vector.broadcast %242 : f32 to vector<16x16xf32>
    %262 = arith.mulf %261, %260 : vector<16x16xf32>
    %263 = arith.addf %233, %262 : vector<16x16xf32>
    %264 = vector.extract_strided_slice %8 {offsets = [3, 0], sizes = [16, 16], strides = [1, 1]} : vector<22x16xf32> to vector<16x16xf32>
    %265 = vector.broadcast %236 : f32 to vector<16x16xf32>
    %266 = arith.mulf %265, %264 : vector<16x16xf32>
    %267 = arith.addf %251, %266 : vector<16x16xf32>
    %268 = vector.extract_strided_slice %15 {offsets = [3, 0], sizes = [16, 16], strides = [1, 1]} : vector<22x16xf32> to vector<16x16xf32>
    %269 = vector.broadcast %243 : f32 to vector<16x16xf32>
    %270 = arith.mulf %269, %268 : vector<16x16xf32>
    %271 = arith.addf %255, %270 : vector<16x16xf32>
    %272 = vector.extract_strided_slice %9 {offsets = [3, 0], sizes = [16, 16], strides = [1, 1]} : vector<22x16xf32> to vector<16x16xf32>
    %273 = vector.broadcast %237 : f32 to vector<16x16xf32>
    %274 = arith.mulf %273, %272 : vector<16x16xf32>
    %275 = arith.addf %259, %274 : vector<16x16xf32>
    %276 = vector.extract_strided_slice %16 {offsets = [3, 0], sizes = [16, 16], strides = [1, 1]} : vector<22x16xf32> to vector<16x16xf32>
    %277 = vector.broadcast %244 : f32 to vector<16x16xf32>
    %278 = arith.mulf %277, %276 : vector<16x16xf32>
    %279 = arith.addf %263, %278 : vector<16x16xf32>
    %280 = vector.extract_strided_slice %10 {offsets = [3, 0], sizes = [16, 16], strides = [1, 1]} : vector<22x16xf32> to vector<16x16xf32>
    %281 = vector.broadcast %238 : f32 to vector<16x16xf32>
    %282 = arith.mulf %281, %280 : vector<16x16xf32>
    %283 = arith.addf %267, %282 : vector<16x16xf32>
    %284 = vector.extract_strided_slice %17 {offsets = [3, 0], sizes = [16, 16], strides = [1, 1]} : vector<22x16xf32> to vector<16x16xf32>
    %285 = vector.broadcast %245 : f32 to vector<16x16xf32>
    %286 = arith.mulf %285, %284 : vector<16x16xf32>
    %287 = arith.addf %271, %286 : vector<16x16xf32>
    %288 = vector.extract_strided_slice %11 {offsets = [3, 0], sizes = [16, 16], strides = [1, 1]} : vector<22x16xf32> to vector<16x16xf32>
    %289 = vector.broadcast %239 : f32 to vector<16x16xf32>
    %290 = arith.mulf %289, %288 : vector<16x16xf32>
    %291 = arith.addf %275, %290 : vector<16x16xf32>
    %292 = vector.extract_strided_slice %18 {offsets = [3, 0], sizes = [16, 16], strides = [1, 1]} : vector<22x16xf32> to vector<16x16xf32>
    %293 = vector.broadcast %246 : f32 to vector<16x16xf32>
    %294 = arith.mulf %293, %292 : vector<16x16xf32>
    %295 = arith.addf %279, %294 : vector<16x16xf32>
    %296 = vector.extract_strided_slice %12 {offsets = [3, 0], sizes = [16, 16], strides = [1, 1]} : vector<22x16xf32> to vector<16x16xf32>
    %297 = vector.broadcast %240 : f32 to vector<16x16xf32>
    %298 = arith.mulf %297, %296 : vector<16x16xf32>
    %299 = arith.addf %283, %298 : vector<16x16xf32>
    %300 = vector.extract_strided_slice %19 {offsets = [3, 0], sizes = [16, 16], strides = [1, 1]} : vector<22x16xf32> to vector<16x16xf32>
    %301 = vector.broadcast %247 : f32 to vector<16x16xf32>
    %302 = arith.mulf %301, %300 : vector<16x16xf32>
    %303 = arith.addf %287, %302 : vector<16x16xf32>
    %c28 = arith.constant 28 : index
    %304 = memref.load %arg2[%c28] : memref<98xf32, #tpu.memory_space<smem>>
    %c29 = arith.constant 29 : index
    %305 = memref.load %arg2[%c29] : memref<98xf32, #tpu.memory_space<smem>>
    %c30 = arith.constant 30 : index
    %306 = memref.load %arg2[%c30] : memref<98xf32, #tpu.memory_space<smem>>
    %c31 = arith.constant 31 : index
    %307 = memref.load %arg2[%c31] : memref<98xf32, #tpu.memory_space<smem>>
    %c32 = arith.constant 32 : index
    %308 = memref.load %arg2[%c32] : memref<98xf32, #tpu.memory_space<smem>>
    %c33 = arith.constant 33 : index
    %309 = memref.load %arg2[%c33] : memref<98xf32, #tpu.memory_space<smem>>
    %c34 = arith.constant 34 : index
    %310 = memref.load %arg2[%c34] : memref<98xf32, #tpu.memory_space<smem>>
    %c77 = arith.constant 77 : index
    %311 = memref.load %arg2[%c77] : memref<98xf32, #tpu.memory_space<smem>>
    %c78 = arith.constant 78 : index
    %312 = memref.load %arg2[%c78] : memref<98xf32, #tpu.memory_space<smem>>
    %c79 = arith.constant 79 : index
    %313 = memref.load %arg2[%c79] : memref<98xf32, #tpu.memory_space<smem>>
    %c80 = arith.constant 80 : index
    %314 = memref.load %arg2[%c80] : memref<98xf32, #tpu.memory_space<smem>>
    %c81 = arith.constant 81 : index
    %315 = memref.load %arg2[%c81] : memref<98xf32, #tpu.memory_space<smem>>
    %c82 = arith.constant 82 : index
    %316 = memref.load %arg2[%c82] : memref<98xf32, #tpu.memory_space<smem>>
    %c83 = arith.constant 83 : index
    %317 = memref.load %arg2[%c83] : memref<98xf32, #tpu.memory_space<smem>>
    %318 = vector.extract_strided_slice %6 {offsets = [4, 0], sizes = [16, 16], strides = [1, 1]} : vector<22x16xf32> to vector<16x16xf32>
    %319 = vector.broadcast %304 : f32 to vector<16x16xf32>
    %320 = arith.mulf %319, %318 : vector<16x16xf32>
    %321 = arith.addf %291, %320 : vector<16x16xf32>
    %322 = vector.extract_strided_slice %13 {offsets = [4, 0], sizes = [16, 16], strides = [1, 1]} : vector<22x16xf32> to vector<16x16xf32>
    %323 = vector.broadcast %311 : f32 to vector<16x16xf32>
    %324 = arith.mulf %323, %322 : vector<16x16xf32>
    %325 = arith.addf %295, %324 : vector<16x16xf32>
    %326 = vector.extract_strided_slice %7 {offsets = [4, 0], sizes = [16, 16], strides = [1, 1]} : vector<22x16xf32> to vector<16x16xf32>
    %327 = vector.broadcast %305 : f32 to vector<16x16xf32>
    %328 = arith.mulf %327, %326 : vector<16x16xf32>
    %329 = arith.addf %299, %328 : vector<16x16xf32>
    %330 = vector.extract_strided_slice %14 {offsets = [4, 0], sizes = [16, 16], strides = [1, 1]} : vector<22x16xf32> to vector<16x16xf32>
    %331 = vector.broadcast %312 : f32 to vector<16x16xf32>
    %332 = arith.mulf %331, %330 : vector<16x16xf32>
    %333 = arith.addf %303, %332 : vector<16x16xf32>
    %334 = vector.extract_strided_slice %8 {offsets = [4, 0], sizes = [16, 16], strides = [1, 1]} : vector<22x16xf32> to vector<16x16xf32>
    %335 = vector.broadcast %306 : f32 to vector<16x16xf32>
    %336 = arith.mulf %335, %334 : vector<16x16xf32>
    %337 = arith.addf %321, %336 : vector<16x16xf32>
    %338 = vector.extract_strided_slice %15 {offsets = [4, 0], sizes = [16, 16], strides = [1, 1]} : vector<22x16xf32> to vector<16x16xf32>
    %339 = vector.broadcast %313 : f32 to vector<16x16xf32>
    %340 = arith.mulf %339, %338 : vector<16x16xf32>
    %341 = arith.addf %325, %340 : vector<16x16xf32>
    %342 = vector.extract_strided_slice %9 {offsets = [4, 0], sizes = [16, 16], strides = [1, 1]} : vector<22x16xf32> to vector<16x16xf32>
    %343 = vector.broadcast %307 : f32 to vector<16x16xf32>
    %344 = arith.mulf %343, %342 : vector<16x16xf32>
    %345 = arith.addf %329, %344 : vector<16x16xf32>
    %346 = vector.extract_strided_slice %16 {offsets = [4, 0], sizes = [16, 16], strides = [1, 1]} : vector<22x16xf32> to vector<16x16xf32>
    %347 = vector.broadcast %314 : f32 to vector<16x16xf32>
    %348 = arith.mulf %347, %346 : vector<16x16xf32>
    %349 = arith.addf %333, %348 : vector<16x16xf32>
    %350 = vector.extract_strided_slice %10 {offsets = [4, 0], sizes = [16, 16], strides = [1, 1]} : vector<22x16xf32> to vector<16x16xf32>
    %351 = vector.broadcast %308 : f32 to vector<16x16xf32>
    %352 = arith.mulf %351, %350 : vector<16x16xf32>
    %353 = arith.addf %337, %352 : vector<16x16xf32>
    %354 = vector.extract_strided_slice %17 {offsets = [4, 0], sizes = [16, 16], strides = [1, 1]} : vector<22x16xf32> to vector<16x16xf32>
    %355 = vector.broadcast %315 : f32 to vector<16x16xf32>
    %356 = arith.mulf %355, %354 : vector<16x16xf32>
    %357 = arith.addf %341, %356 : vector<16x16xf32>
    %358 = vector.extract_strided_slice %11 {offsets = [4, 0], sizes = [16, 16], strides = [1, 1]} : vector<22x16xf32> to vector<16x16xf32>
    %359 = vector.broadcast %309 : f32 to vector<16x16xf32>
    %360 = arith.mulf %359, %358 : vector<16x16xf32>
    %361 = arith.addf %345, %360 : vector<16x16xf32>
    %362 = vector.extract_strided_slice %18 {offsets = [4, 0], sizes = [16, 16], strides = [1, 1]} : vector<22x16xf32> to vector<16x16xf32>
    %363 = vector.broadcast %316 : f32 to vector<16x16xf32>
    %364 = arith.mulf %363, %362 : vector<16x16xf32>
    %365 = arith.addf %349, %364 : vector<16x16xf32>
    %366 = vector.extract_strided_slice %12 {offsets = [4, 0], sizes = [16, 16], strides = [1, 1]} : vector<22x16xf32> to vector<16x16xf32>
    %367 = vector.broadcast %310 : f32 to vector<16x16xf32>
    %368 = arith.mulf %367, %366 : vector<16x16xf32>
    %369 = arith.addf %353, %368 : vector<16x16xf32>
    %370 = vector.extract_strided_slice %19 {offsets = [4, 0], sizes = [16, 16], strides = [1, 1]} : vector<22x16xf32> to vector<16x16xf32>
    %371 = vector.broadcast %317 : f32 to vector<16x16xf32>
    %372 = arith.mulf %371, %370 : vector<16x16xf32>
    %373 = arith.addf %357, %372 : vector<16x16xf32>
    %c35 = arith.constant 35 : index
    %374 = memref.load %arg2[%c35] : memref<98xf32, #tpu.memory_space<smem>>
    %c36 = arith.constant 36 : index
    %375 = memref.load %arg2[%c36] : memref<98xf32, #tpu.memory_space<smem>>
    %c37 = arith.constant 37 : index
    %376 = memref.load %arg2[%c37] : memref<98xf32, #tpu.memory_space<smem>>
    %c38 = arith.constant 38 : index
    %377 = memref.load %arg2[%c38] : memref<98xf32, #tpu.memory_space<smem>>
    %c39 = arith.constant 39 : index
    %378 = memref.load %arg2[%c39] : memref<98xf32, #tpu.memory_space<smem>>
    %c40 = arith.constant 40 : index
    %379 = memref.load %arg2[%c40] : memref<98xf32, #tpu.memory_space<smem>>
    %c41 = arith.constant 41 : index
    %380 = memref.load %arg2[%c41] : memref<98xf32, #tpu.memory_space<smem>>
    %c84 = arith.constant 84 : index
    %381 = memref.load %arg2[%c84] : memref<98xf32, #tpu.memory_space<smem>>
    %c85 = arith.constant 85 : index
    %382 = memref.load %arg2[%c85] : memref<98xf32, #tpu.memory_space<smem>>
    %c86 = arith.constant 86 : index
    %383 = memref.load %arg2[%c86] : memref<98xf32, #tpu.memory_space<smem>>
    %c87 = arith.constant 87 : index
    %384 = memref.load %arg2[%c87] : memref<98xf32, #tpu.memory_space<smem>>
    %c88 = arith.constant 88 : index
    %385 = memref.load %arg2[%c88] : memref<98xf32, #tpu.memory_space<smem>>
    %c89 = arith.constant 89 : index
    %386 = memref.load %arg2[%c89] : memref<98xf32, #tpu.memory_space<smem>>
    %c90 = arith.constant 90 : index
    %387 = memref.load %arg2[%c90] : memref<98xf32, #tpu.memory_space<smem>>
    %388 = vector.extract_strided_slice %6 {offsets = [5, 0], sizes = [16, 16], strides = [1, 1]} : vector<22x16xf32> to vector<16x16xf32>
    %389 = vector.broadcast %374 : f32 to vector<16x16xf32>
    %390 = arith.mulf %389, %388 : vector<16x16xf32>
    %391 = arith.addf %361, %390 : vector<16x16xf32>
    %392 = vector.extract_strided_slice %13 {offsets = [5, 0], sizes = [16, 16], strides = [1, 1]} : vector<22x16xf32> to vector<16x16xf32>
    %393 = vector.broadcast %381 : f32 to vector<16x16xf32>
    %394 = arith.mulf %393, %392 : vector<16x16xf32>
    %395 = arith.addf %365, %394 : vector<16x16xf32>
    %396 = vector.extract_strided_slice %7 {offsets = [5, 0], sizes = [16, 16], strides = [1, 1]} : vector<22x16xf32> to vector<16x16xf32>
    %397 = vector.broadcast %375 : f32 to vector<16x16xf32>
    %398 = arith.mulf %397, %396 : vector<16x16xf32>
    %399 = arith.addf %369, %398 : vector<16x16xf32>
    %400 = vector.extract_strided_slice %14 {offsets = [5, 0], sizes = [16, 16], strides = [1, 1]} : vector<22x16xf32> to vector<16x16xf32>
    %401 = vector.broadcast %382 : f32 to vector<16x16xf32>
    %402 = arith.mulf %401, %400 : vector<16x16xf32>
    %403 = arith.addf %373, %402 : vector<16x16xf32>
    %404 = vector.extract_strided_slice %8 {offsets = [5, 0], sizes = [16, 16], strides = [1, 1]} : vector<22x16xf32> to vector<16x16xf32>
    %405 = vector.broadcast %376 : f32 to vector<16x16xf32>
    %406 = arith.mulf %405, %404 : vector<16x16xf32>
    %407 = arith.addf %391, %406 : vector<16x16xf32>
    %408 = vector.extract_strided_slice %15 {offsets = [5, 0], sizes = [16, 16], strides = [1, 1]} : vector<22x16xf32> to vector<16x16xf32>
    %409 = vector.broadcast %383 : f32 to vector<16x16xf32>
    %410 = arith.mulf %409, %408 : vector<16x16xf32>
    %411 = arith.addf %395, %410 : vector<16x16xf32>
    %412 = vector.extract_strided_slice %9 {offsets = [5, 0], sizes = [16, 16], strides = [1, 1]} : vector<22x16xf32> to vector<16x16xf32>
    %413 = vector.broadcast %377 : f32 to vector<16x16xf32>
    %414 = arith.mulf %413, %412 : vector<16x16xf32>
    %415 = arith.addf %399, %414 : vector<16x16xf32>
    %416 = vector.extract_strided_slice %16 {offsets = [5, 0], sizes = [16, 16], strides = [1, 1]} : vector<22x16xf32> to vector<16x16xf32>
    %417 = vector.broadcast %384 : f32 to vector<16x16xf32>
    %418 = arith.mulf %417, %416 : vector<16x16xf32>
    %419 = arith.addf %403, %418 : vector<16x16xf32>
    %420 = vector.extract_strided_slice %10 {offsets = [5, 0], sizes = [16, 16], strides = [1, 1]} : vector<22x16xf32> to vector<16x16xf32>
    %421 = vector.broadcast %378 : f32 to vector<16x16xf32>
    %422 = arith.mulf %421, %420 : vector<16x16xf32>
    %423 = arith.addf %407, %422 : vector<16x16xf32>
    %424 = vector.extract_strided_slice %17 {offsets = [5, 0], sizes = [16, 16], strides = [1, 1]} : vector<22x16xf32> to vector<16x16xf32>
    %425 = vector.broadcast %385 : f32 to vector<16x16xf32>
    %426 = arith.mulf %425, %424 : vector<16x16xf32>
    %427 = arith.addf %411, %426 : vector<16x16xf32>
    %428 = vector.extract_strided_slice %11 {offsets = [5, 0], sizes = [16, 16], strides = [1, 1]} : vector<22x16xf32> to vector<16x16xf32>
    %429 = vector.broadcast %379 : f32 to vector<16x16xf32>
    %430 = arith.mulf %429, %428 : vector<16x16xf32>
    %431 = arith.addf %415, %430 : vector<16x16xf32>
    %432 = vector.extract_strided_slice %18 {offsets = [5, 0], sizes = [16, 16], strides = [1, 1]} : vector<22x16xf32> to vector<16x16xf32>
    %433 = vector.broadcast %386 : f32 to vector<16x16xf32>
    %434 = arith.mulf %433, %432 : vector<16x16xf32>
    %435 = arith.addf %419, %434 : vector<16x16xf32>
    %436 = vector.extract_strided_slice %12 {offsets = [5, 0], sizes = [16, 16], strides = [1, 1]} : vector<22x16xf32> to vector<16x16xf32>
    %437 = vector.broadcast %380 : f32 to vector<16x16xf32>
    %438 = arith.mulf %437, %436 : vector<16x16xf32>
    %439 = arith.addf %423, %438 : vector<16x16xf32>
    %440 = vector.extract_strided_slice %19 {offsets = [5, 0], sizes = [16, 16], strides = [1, 1]} : vector<22x16xf32> to vector<16x16xf32>
    %441 = vector.broadcast %387 : f32 to vector<16x16xf32>
    %442 = arith.mulf %441, %440 : vector<16x16xf32>
    %443 = arith.addf %427, %442 : vector<16x16xf32>
    %c42 = arith.constant 42 : index
    %444 = memref.load %arg2[%c42] : memref<98xf32, #tpu.memory_space<smem>>
    %c43 = arith.constant 43 : index
    %445 = memref.load %arg2[%c43] : memref<98xf32, #tpu.memory_space<smem>>
    %c44 = arith.constant 44 : index
    %446 = memref.load %arg2[%c44] : memref<98xf32, #tpu.memory_space<smem>>
    %c45 = arith.constant 45 : index
    %447 = memref.load %arg2[%c45] : memref<98xf32, #tpu.memory_space<smem>>
    %c46 = arith.constant 46 : index
    %448 = memref.load %arg2[%c46] : memref<98xf32, #tpu.memory_space<smem>>
    %c47 = arith.constant 47 : index
    %449 = memref.load %arg2[%c47] : memref<98xf32, #tpu.memory_space<smem>>
    %c48 = arith.constant 48 : index
    %450 = memref.load %arg2[%c48] : memref<98xf32, #tpu.memory_space<smem>>
    %c91 = arith.constant 91 : index
    %451 = memref.load %arg2[%c91] : memref<98xf32, #tpu.memory_space<smem>>
    %c92 = arith.constant 92 : index
    %452 = memref.load %arg2[%c92] : memref<98xf32, #tpu.memory_space<smem>>
    %c93 = arith.constant 93 : index
    %453 = memref.load %arg2[%c93] : memref<98xf32, #tpu.memory_space<smem>>
    %c94 = arith.constant 94 : index
    %454 = memref.load %arg2[%c94] : memref<98xf32, #tpu.memory_space<smem>>
    %c95 = arith.constant 95 : index
    %455 = memref.load %arg2[%c95] : memref<98xf32, #tpu.memory_space<smem>>
    %c96 = arith.constant 96 : index
    %456 = memref.load %arg2[%c96] : memref<98xf32, #tpu.memory_space<smem>>
    %c97 = arith.constant 97 : index
    %457 = memref.load %arg2[%c97] : memref<98xf32, #tpu.memory_space<smem>>
    %458 = vector.extract_strided_slice %6 {offsets = [6, 0], sizes = [16, 16], strides = [1, 1]} : vector<22x16xf32> to vector<16x16xf32>
    %459 = vector.broadcast %444 : f32 to vector<16x16xf32>
    %460 = arith.mulf %459, %458 : vector<16x16xf32>
    %461 = arith.addf %431, %460 : vector<16x16xf32>
    %462 = vector.extract_strided_slice %13 {offsets = [6, 0], sizes = [16, 16], strides = [1, 1]} : vector<22x16xf32> to vector<16x16xf32>
    %463 = vector.broadcast %451 : f32 to vector<16x16xf32>
    %464 = arith.mulf %463, %462 : vector<16x16xf32>
    %465 = arith.addf %435, %464 : vector<16x16xf32>
    %466 = vector.extract_strided_slice %7 {offsets = [6, 0], sizes = [16, 16], strides = [1, 1]} : vector<22x16xf32> to vector<16x16xf32>
    %467 = vector.broadcast %445 : f32 to vector<16x16xf32>
    %468 = arith.mulf %467, %466 : vector<16x16xf32>
    %469 = arith.addf %439, %468 : vector<16x16xf32>
    %470 = vector.extract_strided_slice %14 {offsets = [6, 0], sizes = [16, 16], strides = [1, 1]} : vector<22x16xf32> to vector<16x16xf32>
    %471 = vector.broadcast %452 : f32 to vector<16x16xf32>
    %472 = arith.mulf %471, %470 : vector<16x16xf32>
    %473 = arith.addf %443, %472 : vector<16x16xf32>
    %474 = vector.extract_strided_slice %8 {offsets = [6, 0], sizes = [16, 16], strides = [1, 1]} : vector<22x16xf32> to vector<16x16xf32>
    %475 = vector.broadcast %446 : f32 to vector<16x16xf32>
    %476 = arith.mulf %475, %474 : vector<16x16xf32>
    %477 = arith.addf %461, %476 : vector<16x16xf32>
    %478 = vector.extract_strided_slice %15 {offsets = [6, 0], sizes = [16, 16], strides = [1, 1]} : vector<22x16xf32> to vector<16x16xf32>
    %479 = vector.broadcast %453 : f32 to vector<16x16xf32>
    %480 = arith.mulf %479, %478 : vector<16x16xf32>
    %481 = arith.addf %465, %480 : vector<16x16xf32>
    %482 = vector.extract_strided_slice %9 {offsets = [6, 0], sizes = [16, 16], strides = [1, 1]} : vector<22x16xf32> to vector<16x16xf32>
    %483 = vector.broadcast %447 : f32 to vector<16x16xf32>
    %484 = arith.mulf %483, %482 : vector<16x16xf32>
    %485 = arith.addf %469, %484 : vector<16x16xf32>
    %486 = vector.extract_strided_slice %16 {offsets = [6, 0], sizes = [16, 16], strides = [1, 1]} : vector<22x16xf32> to vector<16x16xf32>
    %487 = vector.broadcast %454 : f32 to vector<16x16xf32>
    %488 = arith.mulf %487, %486 : vector<16x16xf32>
    %489 = arith.addf %473, %488 : vector<16x16xf32>
    %490 = vector.extract_strided_slice %10 {offsets = [6, 0], sizes = [16, 16], strides = [1, 1]} : vector<22x16xf32> to vector<16x16xf32>
    %491 = vector.broadcast %448 : f32 to vector<16x16xf32>
    %492 = arith.mulf %491, %490 : vector<16x16xf32>
    %493 = arith.addf %477, %492 : vector<16x16xf32>
    %494 = vector.extract_strided_slice %17 {offsets = [6, 0], sizes = [16, 16], strides = [1, 1]} : vector<22x16xf32> to vector<16x16xf32>
    %495 = vector.broadcast %455 : f32 to vector<16x16xf32>
    %496 = arith.mulf %495, %494 : vector<16x16xf32>
    %497 = arith.addf %481, %496 : vector<16x16xf32>
    %498 = vector.extract_strided_slice %11 {offsets = [6, 0], sizes = [16, 16], strides = [1, 1]} : vector<22x16xf32> to vector<16x16xf32>
    %499 = vector.broadcast %449 : f32 to vector<16x16xf32>
    %500 = arith.mulf %499, %498 : vector<16x16xf32>
    %501 = arith.addf %485, %500 : vector<16x16xf32>
    %502 = vector.extract_strided_slice %18 {offsets = [6, 0], sizes = [16, 16], strides = [1, 1]} : vector<22x16xf32> to vector<16x16xf32>
    %503 = vector.broadcast %456 : f32 to vector<16x16xf32>
    %504 = arith.mulf %503, %502 : vector<16x16xf32>
    %505 = arith.addf %489, %504 : vector<16x16xf32>
    %506 = vector.extract_strided_slice %12 {offsets = [6, 0], sizes = [16, 16], strides = [1, 1]} : vector<22x16xf32> to vector<16x16xf32>
    %507 = vector.broadcast %450 : f32 to vector<16x16xf32>
    %508 = arith.mulf %507, %506 : vector<16x16xf32>
    %509 = arith.addf %493, %508 : vector<16x16xf32>
    %510 = vector.extract_strided_slice %19 {offsets = [6, 0], sizes = [16, 16], strides = [1, 1]} : vector<22x16xf32> to vector<16x16xf32>
    %511 = vector.broadcast %457 : f32 to vector<16x16xf32>
    %512 = arith.mulf %511, %510 : vector<16x16xf32>
    %513 = arith.addf %497, %512 : vector<16x16xf32>
    %514 = arith.addf %509, %513 : vector<16x16xf32>
    %515 = arith.addf %501, %505 : vector<16x16xf32>
    %516 = arith.addf %514, %515 : vector<16x16xf32>
    %517 = arith.negf %516 : vector<16x16xf32>
    %518 = math.exp %517 : vector<16x16xf32>
    %cst_7 = arith.constant 1.000000e+00 : f32
    %519 = vector.broadcast %cst_7 : f32 to vector<16x16xf32>
    %520 = arith.addf %519, %518 : vector<16x16xf32>
    %521 = arith.divf %519, %520 : vector<16x16xf32>
    %c0_8 = arith.constant 0 : index
    %c0_9 = arith.constant 0 : index
    %c0_10 = arith.constant 0 : index
    %c0_11 = arith.constant 0 : index
    %522 = vector.load %arg3[%c0_8, %c0_9, %c0_10, %c0_11] : memref<1x1x16x16xf32, #tpu.memory_space<vmem>>, vector<1x1x16x16xf32>
    %523 = vector.shape_cast %522 : vector<1x1x16x16xf32> to vector<16x16xf32>
    %524 = vector.shape_cast %521 : vector<16x16xf32> to vector<1x1x16x16xf32>
    tpu.vector_store %arg3[%c0_8, %c0_9, %c0_10, %c0_11], %524 {strides = array<i32>} : memref<1x1x16x16xf32, #tpu.memory_space<vmem>>, vector<1x1x16x16xf32>,
    return
  }
  func.func @transform_0(%arg0: i32) -> (i32, i32, i32, i32) {
    %c0_i32 = arith.constant 0 : i32
    %c0_i32_0 = arith.constant 0 : i32
    %c0_i32_1 = arith.constant 0 : i32
    %c0_i32_2 = arith.constant 0 : i32
    return %arg0, %c0_i32, %c0_i32_0, %c0_i32_1 : i32, i32, i32, i32
  }
  func.func @transform_1(%arg0: i32) -> i32 {
    %c0_i32 = arith.constant 0 : i32
    %c0_i32_0 = arith.constant 0 : i32
    return %c0_i32 : i32
  }
  func.func @transform_2(%arg0: i32) -> (i32, i32, i32, i32) {
    %c0_i32 = arith.constant 0 : i32
    %c0_i32_0 = arith.constant 0 : i32
    %c0_i32_1 = arith.constant 0 : i32
    %c0_i32_2 = arith.constant 0 : i32
    return %arg0, %c0_i32, %c0_i32_0, %c0_i32_1 : i32, i32, i32, i32
  }
}

</mosaic_0001>

<llo_original>
// kernel: _spatial_attention_impl.2
$region0: #{_spatial_attention_impl.2}
  #allocation0 [shape = 'u32[]', space=smem, size = 0x4, offset = 0x4, fixed_abs, tag = 'smem constant byte address 0x4 - core index']
  #allocation1 [shape = 'u32[144,128]{1,0:T(1,128)}', space=vmem, size = 0x12000, scoped, tag = 'internal scratch']
  #allocation2 [shape = 'f32[2,256]{1,0:T(2,128)}', space=vmem, size = 0x800, scoped, tag = 'scratch operand']
  %s0 = inlined_call_operand.vmem [shape: f32[2,4,256], index: 0, kind: input, shape index: {}]
  %s1 = inlined_call_operand.vmem [shape: f32[2,2,256], index: 1, kind: output, shape index: {}]
  %s2 = sld [smem:[#allocation0]]
  $region49: #{_spatial_attention_impl.2} parent=0
    _
  %s4 = ssub.s32 1, %s2
  %s5 = scalar_select 0, %s4, %s2
  loop: start=0, step=1, limit=4
  $region2: #{_spatial_attention_impl.2} parent=0 // loop_pre_header
    _
  $region3: #{_spatial_attention_impl.2} parent=0 // loop_header
    %s7 = sphi 0, %s11
    %p8 = scmp.ge.s32.totalorder %s7, 4
    %s14 = sphi 0, %s26
    %s15 = sphi 0, %s22
    %s16 = sphi 0, %s14
    %s17 = sphi 0, %s15
    %s18 = sphi 0, %s16
    %s19 = sphi 0, %s17
    %s31 = sphi 0, %s33
    %s34 = sphi 0, %s31
    %s35 = sphi 0, %s34
    %s51 = sphi 0, %s35
    %s57 = sphi 0, %s59
    %s60 = sphi 0, %s57
    %s61 = sphi 0, %s60
    %s77 = sphi 0, %s61
  $region4: #{_spatial_attention_impl.2} parent=0 // loop_header_branch
    %10 = sbr.rel (%p8) target = $region8
  $region5: #{_spatial_attention_impl.2} parent=0 // loop_body
    %s12 = ssub.s32 %s7, 1
    %s13 = ssub.s32 %s7, 2
    %s20 = sadd.s32 1, %s15
    %p21 = scmp.ge.s32.totalorder %s20, 1
    %s22 = scalar_select %p21, 0, %s20
    %s23 = sadd.s32 1, %s14
    %s24 = scalar_select %p21, %s23, %s14
    %p25 = scmp.ge.s32.totalorder %s24, 2
    %s26 = scalar_select %p25, 0, %s24
    %s27 = ssub.s32 %s14, %s26
    %s28 = ssub.s32 %s15, %s22
    %s29 = sor.u32 %s27, %s28
    %p30 = scmp.eq.s32.totalorder %s29, 0
    %s32 = sadd.s32 %s31, 1
    %s33 = scalar_select %p30, %s31, %s32
    %p36 = pneg %p30
    %p37 = scmp.eq.s32.totalorder %s7, 1
    %p38 = por %p36, %p37
    %p39 = scmp.ne.s32.totalorder %s31, %s34
    %p40 = scmp.eq.s32.totalorder %s7, 0
    %p41 = por %p39, %p40
    %p42 = scmp.ne.s32.totalorder %s31, %s34
    %p43 = scmp.eq.s32.totalorder %s12, 1
    %p44 = por %p42, %p43
    %p45 = scmp.ne.s32.totalorder %s34, %s35
    %p46 = scmp.eq.s32.totalorder %s12, 0
    %p47 = por %p45, %p46
    %p48 = scmp.ne.s32.totalorder %s34, %s35
    %p49 = scmp.eq.s32.totalorder %s13, 1
    %p50 = por %p48, %p49
    %p52 = scmp.ne.s32.totalorder %s35, %s51
    %p53 = scmp.eq.s32.totalorder %s13, 0
    %p54 = por %p52, %p53
    %s55 = ssub.s32 %s14, %s26
    %p56 = scmp.eq.s32.totalorder %s55, 0
    %s58 = sadd.s32 %s57, 1
    %s59 = scalar_select %p56, %s57, %s58
    %p62 = pneg %p56
    %p63 = scmp.eq.s32.totalorder %s7, 1
    %p64 = por %p62, %p63
    %p65 = scmp.ne.s32.totalorder %s57, %s60
    %p66 = scmp.eq.s32.totalorder %s7, 0
    %p67 = por %p65, %p66
    %p68 = scmp.ne.s32.totalorder %s57, %s60
    %p69 = scmp.eq.s32.totalorder %s12, 1
    %p70 = por %p68, %p69
    %p71 = scmp.ne.s32.totalorder %s60, %s61
    %p72 = scmp.eq.s32.totalorder %s12, 0
    %p73 = por %p71, %p72
    %p74 = scmp.ne.s32.totalorder %s60, %s61
    %p75 = scmp.eq.s32.totalorder %s13, 1
    %p76 = por %p74, %p75
    %p78 = scmp.ne.s32.totalorder %s61, %s77
    %p79 = scmp.eq.s32.totalorder %s13, 0
    %p80 = por %p78, %p79
    %p81 = scmp.le.s32.totalorder 1, %s7
    %p82 = scmp.lt.s32.totalorder %s7, 3
    %p83 = pnand %p81, %p82
    %p84 = pneg %p83
    // Predicated region
    $region9: #{_spatial_attention_impl.2} parent=5 // pred_check
      _
    $region10: #{_spatial_attention_impl.2} parent=5 // pred_check_branch
      %86 = sbr.rel (%p83) target = $region12
    $region11: #{_spatial_attention_impl.2} parent=5 // pred_region
      %s87 = ssub.s32 %s7, 1
    $region12: #{_spatial_attention_impl.2} parent=5 // pred_fallthru
      _
    %p88 = scmp.lt.s32.totalorder %s7, 2
    // Predicated region
    $region13: #{_spatial_attention_impl.2} parent=5 // pred_check
      %p89 = pneg %p88
    $region14: #{_spatial_attention_impl.2} parent=5 // pred_check_branch
      %91 = sbr.rel (%p89) target = $region16
    $region15: #{_spatial_attention_impl.2} parent=5 // pred_region
      // Predicated region
      $region17: #{_spatial_attention_impl.2} parent=15 // pred_check
        %p92 = pneg %p41
      $region18: #{_spatial_attention_impl.2} parent=15 // pred_check_branch
        %94 = sbr.rel (%p92) target = $region20
      $region19: #{_spatial_attention_impl.2} parent=15 // pred_region
        %p95 = scmp.lt.s32.totalorder %s14, 1
        %s96 = scalar_select %p95, %s14, 1
        %p97 = scmp.lt.s32.totalorder %s15, 0
        %s98 = scalar_select %p97, %s15, 0
        %s99 = smul.addr %s98, 2
        %s100 = smul.addr %s96, 2
        %s101 = sadd.s32 %s99, %s100
        %s102 = smul.addr %s101, 4
        %s103 = scalar_lea.vmem %s0, %s102
      $region20: #{_spatial_attention_impl.2} parent=15 // pred_fallthru
        _
    $region16: #{_spatial_attention_impl.2} parent=5 // pred_fallthru
      _
    %p104 = scmp.le.s32.totalorder 1, %s7
    %p105 = scmp.lt.s32.totalorder %s7, 3
    %p106 = pnand %p104, %p105
    %p107 = pneg %p106
    // Predicated region
    $region21: #{_spatial_attention_impl.2} parent=5 // pred_check
      _
    $region22: #{_spatial_attention_impl.2} parent=5 // pred_check_branch
      %109 = sbr.rel (%p106) target = $region24
    $region23: #{_spatial_attention_impl.2} parent=5 // pred_region
      %s110 = ssub.s32 %s7, 1
      %p111 = scmp.lt.s32.totalorder %s16, 1
      %s112 = scalar_select %p111, %s16, 1
      %p113 = scmp.lt.s32.totalorder %s17, 0
      %s114 = scalar_select %p113, %s17, 0
      %s115 = smul.addr %s114, 2
      %s116 = smul.addr %s112, 2
      %s117 = sadd.s32 %s115, %s116
      %s118 = smul.addr %s117, 4
      %s119 = scalar_lea.vmem %s0, %s118
      %p120 = pneg %p47
      %p121 = pneg %p44
      %p122 = pneg %p73
      %p123 = pneg %p70
      %p124 = scmp.lt.s32.totalorder %s16, 1
      %s125 = scalar_select %p124, %s16, 1
      %s126 = smul.addr %s125, 2
      %s127 = smul.addr %s126, 2
      %s128 = scalar_lea.vmem %s1, %s127
      %p129 = scmp.lt.s32.totalorder %s16, 1
      %s130 = scalar_select %p129, %s16, 1
      %p131 = scmp.lt.s32.totalorder %s17, 0
      %s132 = scalar_select %p131, %s17, 0
      %s133 = smul.addr %s132, 2
      %s134 = smul.addr %s130, 2
      %s135 = sadd.s32 %s133, %s134
      %s136 = smul.addr %s135, 4
      %s137 = scalar_lea.vmem %s0, %s136
      %p138 = scmp.lt.s32.totalorder %s16, 1
      %s139 = scalar_select %p138, %s16, 1
      %s140 = smul.addr %s139, 2
      %s141 = smul.addr %s140, 2
      %s142 = scalar_lea.vmem %s1, %s141
      %v143 = vld [vmem:[%s137] sm:$0xff]
      %v145 = vcombine.high %v143, %v143
      %vm147 = vcmask 1043456
      %v148 = vsel %vm147, %v143, 0.0
      %v149 = vrot.slane %v148, 4
      %v150 = vadd.f32 %v148, %v149
      %v151 = vrot.slane %v150, 2
      %v152 = vadd.f32 %v150, %v151
      %v153 = vrot.slane %v152, 1
      %v154 = vadd.f32 %v152, %v153
      %v155 = vsel %vm147, %v145, 0.0
      %v156 = vrot.slane %v155, 4
      %v157 = vadd.f32 %v155, %v156
      %v158 = vrot.slane %v157, 2
      %v159 = vadd.f32 %v157, %v158
      %v160 = vrot.slane %v159, 1
      %v161 = vadd.f32 %v159, %v160
      %v162 = vsel %vm147, %v143, -inf
      %v163 = vrot.slane %v162, 4
      %v164 = vmax.f32 %v162, %v163
      %v165 = vrot.slane %v164, 2
      %v166 = vmax.f32 %v164, %v165
      %v167 = vrot.slane %v166, 1
      %v168 = vmax.f32 %v166, %v167
      %v169 = vsel %vm147, %v145, -inf
      %v170 = vrot.slane %v169, 4
      %v171 = vmax.f32 %v169, %v170
      %v172 = vrot.slane %v171, 2
      %v173 = vmax.f32 %v171, %v172
      %v174 = vrot.slane %v173, 1
      %v175 = vmax.f32 %v173, %v174
      %p176 = scmp.eq.s32.totalorder %s17, 0
      // Predicated region
      $region25: #{_spatial_attention_impl.2} parent=23 // pred_check
        %p177 = pneg %p176
      $region26: #{_spatial_attention_impl.2} parent=23 // pred_check_branch
        %179 = sbr.rel (%p177) target = $region28
      $region27: #{_spatial_attention_impl.2} parent=23 // pred_region
        %v182 = vcombine.low %v154, %v161
        %v184 = vunpack.c.l.s4 1966171168
        %v185 = vunpack.c.0.s8 %v184
        %v186 = vlaneseq
        %v187 = vshrl.u32 %v186, 7
        %v188 = vsub.s32 %v185, %v187
        %v189 = vrot.slane %v182, %v188
        %v191 = vunpack.c.l.s4 1966171168
        %v192 = vunpack.c.0.s8 %v191
        %v193 = vlaneseq
        %v194 = vshrl.u32 %v193, 7
        %v195 = vsub.s32 %v192, %v194
        %v196 = vrot.slane %v189, %v195
        %v198 = vlaneseq
        %vm199 = vcmp.ge.s32.totalorder %v198, 0
        %vm200 = vcmp.lt.s32.totalorder %v198, 256
        %vm201 = vmand %vm199, %vm200
        %202 = vst.msk [vmem:[#allocation2] ss:$2 sm:$0x3] %vm201, %v196
        %v205 = vcombine.low %v168, %v175
        %v207 = vunpack.c.l.s4 1966171168
        %v208 = vunpack.c.0.s8 %v207
        %v209 = vlaneseq
        %v210 = vshrl.u32 %v209, 7
        %v211 = vsub.s32 %v208, %v210
        %v212 = vrot.slane %v205, %v211
        %v214 = vunpack.c.l.s4 1966171168
        %v215 = vunpack.c.0.s8 %v214
        %v216 = vlaneseq
        %v217 = vshrl.u32 %v216, 7
        %v218 = vsub.s32 %v215, %v217
        %v219 = vrot.slane %v212, %v218
        %s221 = scalar_lea.vmem [#allocation2], 1
        %222 = vst.msk [vmem:[%s221] ss:$2 sm:$0x3] %vm201, %v219
      $region28: #{_spatial_attention_impl.2} parent=23 // pred_fallthru
        _
      %p223 = scmp.gt.s32.totalorder %s17, 0
      // Predicated region
      $region29: #{_spatial_attention_impl.2} parent=23 // pred_check
        %p224 = pneg %p223
      $region30: #{_spatial_attention_impl.2} parent=23 // pred_check_branch
        %226 = sbr.rel (%p224) target = $region32
      $region31: #{_spatial_attention_impl.2} parent=23 // pred_region
        %v227 = vld [vmem:[#allocation2] ss:$2 sm:$0x3]
        %v230 = vcombine.low %v154, %v161
        %v232 = vunpack.c.l.s4 1966171168
        %v233 = vunpack.c.0.s8 %v232
        %v234 = vlaneseq
        %v235 = vshrl.u32 %v234, 7
        %v236 = vsub.s32 %v233, %v235
        %v237 = vrot.slane %v230, %v236
        %v239 = vunpack.c.l.s4 1966171168
        %v240 = vunpack.c.0.s8 %v239
        %v241 = vlaneseq
        %v242 = vshrl.u32 %v241, 7
        %v243 = vsub.s32 %v240, %v242
        %v244 = vrot.slane %v237, %v243
        %v246 = vadd.f32 %v227, %v244
        %v247 = vlaneseq
        %vm248 = vcmp.ge.s32.totalorder %v247, 0
        %vm249 = vcmp.lt.s32.totalorder %v247, 256
        %vm250 = vmand %vm248, %vm249
        %251 = vst.msk [vmem:[#allocation2] ss:$2 sm:$0x3] %vm250, %v246
        %s252 = scalar_lea.vmem [#allocation2], 1
        %v253 = vld [vmem:[%s252] ss:$2 sm:$0x3]
        %v256 = vcombine.low %v168, %v175
        %v258 = vunpack.c.l.s4 1966171168
        %v259 = vunpack.c.0.s8 %v258
        %v260 = vlaneseq
        %v261 = vshrl.u32 %v260, 7
        %v262 = vsub.s32 %v259, %v261
        %v263 = vrot.slane %v256, %v262
        %v265 = vunpack.c.l.s4 1966171168
        %v266 = vunpack.c.0.s8 %v265
        %v267 = vlaneseq
        %v268 = vshrl.u32 %v267, 7
        %v269 = vsub.s32 %v266, %v268
        %v270 = vrot.slane %v263, %v269
        %v272 = vmax.f32 %v253, %v270
        %273 = vst.msk [vmem:[%s252] ss:$2 sm:$0x3] %vm250, %v272
      $region32: #{_spatial_attention_impl.2} parent=23 // pred_fallthru
        _
      // Predicated region
      $region33: #{_spatial_attention_impl.2} parent=23 // pred_check
        %p274 = pneg %p176
      $region34: #{_spatial_attention_impl.2} parent=23 // pred_check_branch
        %276 = sbr.rel (%p274) target = $region36
      $region35: #{_spatial_attention_impl.2} parent=23 // pred_region
        %v277 = vld [vmem:[#allocation2] sm:$0xf]
        %278 = vst [vmem:[%s142] sm:$0xf] %v277
      $region36: #{_spatial_attention_impl.2} parent=23 // pred_fallthru
        _
      %p279 = scmp.lt.s32.totalorder %s16, 1
      %s280 = scalar_select %p279, %s16, 1
      %s281 = smul.addr %s280, 2
      %s282 = smul.addr %s281, 2
      %s283 = scalar_lea.vmem %s1, %s282
      // Predicated region
      $region37: #{_spatial_attention_impl.2} parent=23 // pred_check
        %p284 = pneg %p70
      $region38: #{_spatial_attention_impl.2} parent=23 // pred_check_branch
        %286 = sbr.rel (%p284) target = $region40
      $region39: #{_spatial_attention_impl.2} parent=23 // pred_region
        _
      $region40: #{_spatial_attention_impl.2} parent=23 // pred_fallthru
        _
    $region24: #{_spatial_attention_impl.2} parent=5 // pred_fallthru
      _
    %p287 = scmp.le.s32.totalorder 2, %s7
    // Predicated region
    $region41: #{_spatial_attention_impl.2} parent=5 // pred_check
      %p288 = pneg %p287
    $region42: #{_spatial_attention_impl.2} parent=5 // pred_check_branch
      %290 = sbr.rel (%p288) target = $region44
    $region43: #{_spatial_attention_impl.2} parent=5 // pred_region
      %s291 = ssub.s32 %s7, 2
      // Predicated region
      $region45: #{_spatial_attention_impl.2} parent=43 // pred_check
        %p292 = pneg %p76
      $region46: #{_spatial_attention_impl.2} parent=43 // pred_check_branch
        %294 = sbr.rel (%p292) target = $region48
      $region47: #{_spatial_attention_impl.2} parent=43 // pred_region
        %p295 = scmp.lt.s32.totalorder %s18, 1
        %s296 = scalar_select %p295, %s18, 1
        %s297 = smul.addr %s296, 2
        %s298 = smul.addr %s297, 2
        %s299 = scalar_lea.vmem %s1, %s298
      $region48: #{_spatial_attention_impl.2} parent=43 // pred_fallthru
        _
    $region44: #{_spatial_attention_impl.2} parent=5 // pred_fallthru
      _
  $region6: #{_spatial_attention_impl.2} parent=0 // loop_footer
    %s11 = sadd.s32 1, %s7
  $region7: #{_spatial_attention_impl.2} parent=0 // loop_footer_branch
    %6 = sbr.rel target = $region3
  $region8: #{_spatial_attention_impl.2} parent=0 // loop_exit
    _

// kernel: _spatial_attention_impl.3
$region0: #{_spatial_attention_impl.3}
  #allocation0 [shape = 'u32[]', space=smem, size = 0x4, offset = 0x4, fixed_abs, tag = 'smem constant byte address 0x4 - core index']
  #allocation1 [shape = 'u32[144,128]{1,0:T(1,128)}', space=vmem, size = 0x12000, scoped, tag = 'internal scratch']
  %s0 = inlined_call_operand.vmem [shape: f32[2,2,22,22], index: 0, kind: input, shape index: {}]
  %s1 = inlined_call_operand.vmem [shape: f32[98], index: 1, kind: input, shape index: {}]
  %s2 = inlined_call_operand.hbm [shape: f32[2,1,16,16], index: 2, kind: output, shape index: {}]
  %s3 = sld [smem:[#allocation0]]
  $region45: #{_spatial_attention_impl.3} parent=0
    _
  %s5 = ssub.s32 1, %s3
  %s6 = scalar_select 0, %s5, %s3
  $region1: #{_spatial_attention_impl.3} parent=0
    #allocation2 [shape = 'u8[512]{0}', space=smem, size = 0x200, scoped, tag = 'input window, operand 1, single buffered']
    #allocation3 [shape = 's32[2]{0}', space=sflag, size = 0x8, scoped, tag = 'scoped memory for _spatial_attention_impl.3']
    #allocation4 [shape = 's32[2]{0}', space=sflag, size = 0x8, scoped, tag = 'scoped memory for _spatial_attention_impl.3']
    #allocation5 [shape = 'u8[16384]{0}', space=vmem, size = 0x4000, scoped, tag = 'output window, operand 0']
    %7 = vsyncpa [#allocation4], 0
    %8 = vsyncpa [#allocation3], 0
    %s9 = scalar_lea.sflag [#allocation3], 1
    %10 = vsyncpa %s9, 0
    loop: start=0, step=1, limit=4
    $region2: #{_spatial_attention_impl.3} parent=1 // loop_pre_header
      _
    $region3: #{_spatial_attention_impl.3} parent=1 // loop_header
      %s12 = sphi 0, %s16
      %p13 = scmp.ge.s32.totalorder %s12, 4
      %s22 = sphi 0, %s24
      %s25 = sphi 0, %s22
      %s26 = sphi 0, %s25
      %s42 = sphi 0, %s26
      %s46 = sphi 0, %s46
      %s48 = sphi 0, %s46
      %s49 = sphi 0, %s48
      %s63 = sphi 0, %s49
      %s69 = sphi 0, %s71
      %s72 = sphi 0, %s69
      %s73 = sphi 0, %s72
      %s89 = sphi 0, %s73
    $region4: #{_spatial_attention_impl.3} parent=1 // loop_header_branch
      %15 = sbr.rel (%p13) target = $region8
    $region5: #{_spatial_attention_impl.3} parent=1 // loop_body
      %s17 = ssub.s32 %s12, 1
      %s18 = ssub.s32 %s12, 2
      %s19 = sadd.s32 %s12, 1
      %s20 = ssub.s32 %s12, %s19
      %p21 = scmp.eq.s32.totalorder %s20, 0
      %s23 = sadd.s32 %s22, 1
      %s24 = scalar_select %p21, %s22, %s23
      %p27 = pneg %p21
      %p28 = scmp.eq.s32.totalorder %s12, 1
      %p29 = por %p27, %p28
      %p30 = scmp.ne.s32.totalorder %s22, %s25
      %p31 = scmp.eq.s32.totalorder %s12, 0
      %p32 = por %p30, %p31
      %p33 = scmp.ne.s32.totalorder %s22, %s25
      %p34 = scmp.eq.s32.totalorder %s17, 1
      %p35 = por %p33, %p34
      %p36 = scmp.ne.s32.totalorder %s25, %s26
      %p37 = scmp.eq.s32.totalorder %s17, 0
      %p38 = por %p36, %p37
      %p39 = scmp.ne.s32.totalorder %s25, %s26
      %p40 = scmp.eq.s32.totalorder %s18, 1
      %p41 = por %p39, %p40
      %p43 = scmp.ne.s32.totalorder %s26, %s42
      %p44 = scmp.eq.s32.totalorder %s18, 0
      %p45 = por %p43, %p44
      %s47 = sadd.s32 %s46, 1
      %p50 = scmp.eq.s32.totalorder %s12, 1
      %p51 = scmp.ne.s32.totalorder %s46, %s48
      %p52 = scmp.eq.s32.totalorder %s12, 0
      %p53 = por %p51, %p52
      %p54 = scmp.ne.s32.totalorder %s46, %s48
      %p55 = scmp.eq.s32.totalorder %s17, 1
      %p56 = por %p54, %p55
      %p57 = scmp.ne.s32.totalorder %s48, %s49
      %p58 = scmp.eq.s32.totalorder %s17, 0
      %p59 = por %p57, %p58
      %p60 = scmp.ne.s32.totalorder %s48, %s49
      %p61 = scmp.eq.s32.totalorder %s18, 1
      %p62 = por %p60, %p61
      %p64 = scmp.ne.s32.totalorder %s49, %s63
      %p65 = scmp.eq.s32.totalorder %s18, 0
      %p66 = por %p64, %p65
      %s67 = ssub.s32 %s12, %s19
      %p68 = scmp.eq.s32.totalorder %s67, 0
      %s70 = sadd.s32 %s69, 1
      %s71 = scalar_select %p68, %s69, %s70
      %p74 = pneg %p68
      %p75 = scmp.eq.s32.totalorder %s12, 1
      %p76 = por %p74, %p75
      %p77 = scmp.ne.s32.totalorder %s69, %s72
      %p78 = scmp.eq.s32.totalorder %s12, 0
      %p79 = por %p77, %p78
      %p80 = scmp.ne.s32.totalorder %s69, %s72
      %p81 = scmp.eq.s32.totalorder %s17, 1
      %p82 = por %p80, %p81
      %p83 = scmp.ne.s32.totalorder %s72, %s73
      %p84 = scmp.eq.s32.totalorder %s17, 0
      %p85 = por %p83, %p84
      %p86 = scmp.ne.s32.totalorder %s72, %s73
      %p87 = scmp.eq.s32.totalorder %s18, 1
      %p88 = por %p86, %p87
      %p90 = scmp.ne.s32.totalorder %s73, %s89
      %p91 = scmp.eq.s32.totalorder %s18, 0
      %p92 = por %p90, %p91
      %p93 = scmp.le.s32.totalorder 1, %s12
      %p94 = scmp.lt.s32.totalorder %s12, 3
      %p95 = pnand %p93, %p94
      %p96 = pneg %p95
      // Predicated region
      $region9: #{_spatial_attention_impl.3} parent=5 // pred_check
        _
      $region10: #{_spatial_attention_impl.3} parent=5 // pred_check_branch
        %98 = sbr.rel (%p95) target = $region12
      $region11: #{_spatial_attention_impl.3} parent=5 // pred_region
        %s99 = ssub.s32 %s12, 1
        // Predicated region
        $region13: #{_spatial_attention_impl.3} parent=11 // pred_check
          %p100 = pneg %p59
        $region14: #{_spatial_attention_impl.3} parent=11 // pred_check_branch
          %102 = sbr.rel (%p100) target = $region16
        $region15: #{_spatial_attention_impl.3} parent=11 // pred_region
          %s104 = ssub.s32 16, 16
          %105 = vsyncadd [#allocation4], %s104
          %s107 = sshll.u32 %s1, 4
          %s108 = int_to_ptr.vmem [resolvable:$true] %s107
          %110 = dma.vmem_to_smem %s108, 16, [#allocation2], [#allocation4]
        $region16: #{_spatial_attention_impl.3} parent=11 // pred_fallthru
          _
      $region12: #{_spatial_attention_impl.3} parent=5 // pred_fallthru
        _
      %p111 = scmp.lt.s32.totalorder %s12, 2
      // Predicated region
      $region17: #{_spatial_attention_impl.3} parent=5 // pred_check
        %p112 = pneg %p111
      $region18: #{_spatial_attention_impl.3} parent=5 // pred_check_branch
        %114 = sbr.rel (%p112) target = $region20
      $region19: #{_spatial_attention_impl.3} parent=5 // pred_region
        // Predicated region
        $region21: #{_spatial_attention_impl.3} parent=19 // pred_check
          %p115 = pneg %p32
        $region22: #{_spatial_attention_impl.3} parent=19 // pred_check_branch
          %117 = sbr.rel (%p115) target = $region24
        $region23: #{_spatial_attention_impl.3} parent=19 // pred_region
          %p118 = scmp.lt.s32.totalorder %s12, 1
          %s119 = scalar_select %p118, %s12, 1
          %s120 = smul.addr %s119, 6
          %s121 = smul.addr %s120, 8
          %s122 = scalar_lea.vmem %s0, %s121
        $region24: #{_spatial_attention_impl.3} parent=19 // pred_fallthru
          _
      $region20: #{_spatial_attention_impl.3} parent=5 // pred_fallthru
        _
      %p123 = scmp.le.s32.totalorder 1, %s12
      %p124 = scmp.lt.s32.totalorder %s12, 3
      %p125 = pnand %p123, %p124
      %p126 = pneg %p125
      // Predicated region
      $region25: #{_spatial_attention_impl.3} parent=5 // pred_check
        _
      $region26: #{_spatial_attention_impl.3} parent=5 // pred_check_branch
        %128 = sbr.rel (%p125) target = $region28
      $region27: #{_spatial_attention_impl.3} parent=5 // pred_region
        %s129 = ssub.s32 %s12, 1
        // Predicated region
        $region29: #{_spatial_attention_impl.3} parent=27 // pred_check
          %p130 = pneg %p59
        $region30: #{_spatial_attention_impl.3} parent=27 // pred_check_branch
          %132 = sbr.rel (%p130) target = $region32
        $region31: #{_spatial_attention_impl.3} parent=27 // pred_region
          %133 = dma.done [#allocation4], 16
        $region32: #{_spatial_attention_impl.3} parent=27 // pred_fallthru
          _
        %134 = sfence
        %p135 = scmp.lt.s32.totalorder %s17, 1
        %s136 = scalar_select %p135, %s17, 1
        %s137 = smul.addr %s136, 6
        %s138 = smul.addr %s137, 8
        %s139 = scalar_lea.vmem %s0, %s138
        %p140 = pneg %p38
        %p141 = pneg %p35
        %p142 = pneg %p59
        %p143 = pneg %p56
        %p144 = pneg %p85
        %p145 = pneg %p82
        %s146 = sand.u32 %s72, 1
        %s147 = scalar_lea.sflag [#allocation3], %s146
        %s148 = sand.u32 %s72, 1
        %s149 = smul.addr %s148, 16
        %s150 = scalar_lea.vmem [#allocation5], %s149
        %p151 = scmp.lt.s32.totalorder %s17, 1
        %s152 = scalar_select %p151, %s17, 1
        %s153 = smul.addr %s152, 6
        %s154 = smul.addr %s153, 8
        %s155 = scalar_lea.vmem %s0, %s154
        %v156 = vld [vmem:[%s155] sm:$0xff]
        %v157 = vld [vmem:[%s155 + $0x8] sm:$0xff]
        %v158 = vld [vmem:[%s155 + $0x10] sm:$0x3f]
        %v159 = vld [vmem:[%s155 + $0x18] sm:$0xff]
        %v160 = vld [vmem:[%s155 + $0x20] sm:$0xff]
        %v161 = vld [vmem:[%s155 + $0x28] sm:$0x3f]
        %s162 = sld [smem:[#allocation2]]
        %s163 = sld [smem:[#allocation2 + $0x1]]
        %s164 = sld [smem:[#allocation2 + $0x2]]
        %s165 = sld [smem:[#allocation2 + $0x3]]
        %s166 = sld [smem:[#allocation2 + $0x4]]
        %s167 = sld [smem:[#allocation2 + $0x5]]
        %s168 = sld [smem:[#allocation2 + $0x6]]
        %s169 = sld [smem:[#allocation2 + $0x31]]
        %s170 = sld [smem:[#allocation2 + $0x32]]
        %s171 = sld [smem:[#allocation2 + $0x33]]
        %s172 = sld [smem:[#allocation2 + $0x34]]
        %s173 = sld [smem:[#allocation2 + $0x35]]
        %s174 = sld [smem:[#allocation2 + $0x36]]
        %s175 = sld [smem:[#allocation2 + $0x37]]
        %v176 = vstv %s162
        %v177 = vmul.f32 %v176, %v156
        %v178 = vmul.f32 %v176, %v157
        %v179 = vadd.f32 %v177, 0.0
        %v180 = vadd.f32 %v178, 0.0
        %v181 = vstv %s169
        %v182 = vmul.f32 %v181, %v159
        %v183 = vmul.f32 %v181, %v160
        %v184 = vadd.f32 %v182, 0.0
        %v185 = vadd.f32 %v183, 0.0
        %v186 = vstv %s163
        %v187 = vmul.f32 %v186, %v156
        %v188 = vmul.f32 %v186, %v157
        %v189 = vadd.f32 %v187, 0.0
        %v190 = vadd.f32 %v188, 0.0
        %v191 = vstv %s170
        %v192 = vmul.f32 %v191, %v159
        %v193 = vmul.f32 %v191, %v160
        %v194 = vadd.f32 %v192, 0.0
        %v195 = vadd.f32 %v193, 0.0
        %v196 = vstv %s164
        %v197 = vmul.f32 %v196, %v156
        %v198 = vmul.f32 %v196, %v157
        %201 = vrot.lane.b32.xlu0 %v197, 126
        %v202 = vpop.permute.xlu0 %201
        %203 = vrot.lane.b32.xlu0 %v198, 126
        %v204 = vpop.permute.xlu0 %203
        %v207 = vadd.f32 %v179, %v202
        %v208 = vadd.f32 %v180, %v204
        %v209 = vstv %s171
        %v210 = vmul.f32 %v209, %v159
        %v211 = vmul.f32 %v209, %v160
        %214 = vrot.lane.b32.xlu0 %v210, 126
        %v215 = vpop.permute.xlu0 %214
        %216 = vrot.lane.b32.xlu0 %v211, 126
        %v217 = vpop.permute.xlu0 %216
        %v220 = vadd.f32 %v184, %v215
        %v221 = vadd.f32 %v185, %v217
        %v222 = vstv %s165
        %v223 = vmul.f32 %v222, %v156
        %v224 = vmul.f32 %v222, %v157
        %227 = vrot.lane.b32.xlu0 %v223, 126
        %v228 = vpop.permute.xlu0 %227
        %229 = vrot.lane.b32.xlu0 %v224, 126
        %v230 = vpop.permute.xlu0 %229
        %v233 = vadd.f32 %v189, %v228
        %v234 = vadd.f32 %v190, %v230
        %v235 = vstv %s172
        %v236 = vmul.f32 %v235, %v159
        %v237 = vmul.f32 %v235, %v160
        %240 = vrot.lane.b32.xlu0 %v236, 126
        %v241 = vpop.permute.xlu0 %240
        %242 = vrot.lane.b32.xlu0 %v237, 126
        %v243 = vpop.permute.xlu0 %242
        %v246 = vadd.f32 %v194, %v241
        %v247 = vadd.f32 %v195, %v243
        %v248 = vstv %s166
        %v249 = vmul.f32 %v248, %v156
        %v250 = vmul.f32 %v248, %v157
        %253 = vrot.lane.b32.xlu0 %v249, 124
        %v254 = vpop.permute.xlu0 %253
        %255 = vrot.lane.b32.xlu0 %v250, 124
        %v256 = vpop.permute.xlu0 %255
        %v259 = vadd.f32 %v207, %v254
        %v260 = vadd.f32 %v208, %v256
        %v261 = vstv %s173
        %v262 = vmul.f32 %v261, %v159
        %v263 = vmul.f32 %v261, %v160
        %266 = vrot.lane.b32.xlu0 %v262, 124
        %v267 = vpop.permute.xlu0 %266
        %268 = vrot.lane.b32.xlu0 %v263, 124
        %v269 = vpop.permute.xlu0 %268
        %v272 = vadd.f32 %v220, %v267
        %v273 = vadd.f32 %v221, %v269
        %v274 = vstv %s167
        %v275 = vmul.f32 %v274, %v156
        %v276 = vmul.f32 %v274, %v157
        %279 = vrot.lane.b32.xlu0 %v275, 124
        %v280 = vpop.permute.xlu0 %279
        %281 = vrot.lane.b32.xlu0 %v276, 124
        %v282 = vpop.permute.xlu0 %281
        %v285 = vadd.f32 %v233, %v280
        %v286 = vadd.f32 %v234, %v282
        %v287 = vstv %s174
        %v288 = vmul.f32 %v287, %v159
        %v289 = vmul.f32 %v287, %v160
        %292 = vrot.lane.b32.xlu0 %v288, 124
        %v293 = vpop.permute.xlu0 %292
        %294 = vrot.lane.b32.xlu0 %v289, 124
        %v295 = vpop.permute.xlu0 %294
        %v298 = vadd.f32 %v246, %v293
        %v299 = vadd.f32 %v247, %v295
        %v300 = vstv %s168
        %v301 = vmul.f32 %v300, %v156
        %v302 = vmul.f32 %v300, %v157
        %305 = vrot.lane.b32.xlu0 %v301, 122
        %v306 = vpop.permute.xlu0 %305
        %307 = vrot.lane.b32.xlu0 %v302, 122
        %v308 = vpop.permute.xlu0 %307
        %v311 = vadd.f32 %v259, %v306
        %v312 = vadd.f32 %v260, %v308
        %v313 = vstv %s175
        %v314 = vmul.f32 %v313, %v159
        %v315 = vmul.f32 %v313, %v160
        %318 = vrot.lane.b32.xlu0 %v314, 122
        %v319 = vpop.permute.xlu0 %318
        %320 = vrot.lane.b32.xlu0 %v315, 122
        %v321 = vpop.permute.xlu0 %320
        %v324 = vadd.f32 %v272, %v319
        %v325 = vadd.f32 %v273, %v321
        %s326 = sld [smem:[#allocation2 + $0x7]]
        %s327 = sld [smem:[#allocation2 + $0x8]]
        %s328 = sld [smem:[#allocation2 + $0x9]]
        %s329 = sld [smem:[#allocation2 + $0xa]]
        %s330 = sld [smem:[#allocation2 + $0xb]]
        %s331 = sld [smem:[#allocation2 + $0xc]]
        %s332 = sld [smem:[#allocation2 + $0xd]]
        %s333 = sld [smem:[#allocation2 + $0x38]]
        %s334 = sld [smem:[#allocation2 + $0x39]]
        %s335 = sld [smem:[#allocation2 + $0x3a]]
        %s336 = sld [smem:[#allocation2 + $0x3b]]
        %s337 = sld [smem:[#allocation2 + $0x3c]]
        %s338 = sld [smem:[#allocation2 + $0x3d]]
        %s339 = sld [smem:[#allocation2 + $0x3e]]
        %v340 = vstv %s326
        %v341 = vmul.f32 %v340, %v156
        %v342 = vmul.f32 %v340, %v157
        %v343 = vmul.f32 %v340, %v158
        %vm347 = vcmask 1046528
        %v348 = vrot.slane %v341, 1
        %v349 = vrot.slane %v342, 1
        %v350 = vsel %vm347, %v348, %v349
        %v351 = vrot.slane %v343, 1
        %v352 = vsel %vm347, %v349, %v351
        %353 = vrot.lane.b32.xlu0 %v350, 1
        %v354 = vpop.permute.xlu0 %353
        %355 = vrot.lane.b32.xlu0 %v352, 1
        %v356 = vpop.permute.xlu0 %355
        %v359 = vadd.f32 %v285, %v354
        %v360 = vadd.f32 %v286, %v356
        %v361 = vstv %s333
        %v362 = vmul.f32 %v361, %v159
        %v363 = vmul.f32 %v361, %v160
        %v364 = vmul.f32 %v361, %v161
        %v368 = vrot.slane %v362, 1
        %v369 = vrot.slane %v363, 1
        %v370 = vsel %vm347, %v368, %v369
        %v371 = vrot.slane %v364, 1
        %v372 = vsel %vm347, %v369, %v371
        %373 = vrot.lane.b32.xlu0 %v370, 1
        %v374 = vpop.permute.xlu0 %373
        %375 = vrot.lane.b32.xlu0 %v372, 1
        %v376 = vpop.permute.xlu0 %375
        %v379 = vadd.f32 %v298, %v374
        %v380 = vadd.f32 %v299, %v376
        %v381 = vstv %s327
        %v382 = vmul.f32 %v381, %v156
        %v383 = vmul.f32 %v381, %v157
        %v384 = vmul.f32 %v381, %v158
        %v388 = vrot.slane %v382, 1
        %v389 = vrot.slane %v383, 1
        %v390 = vsel %vm347, %v388, %v389
        %v391 = vrot.slane %v384, 1
        %v392 = vsel %vm347, %v389, %v391
        %393 = vrot.lane.b32.xlu0 %v390, 127
        %v394 = vpop.permute.xlu0 %393
        %395 = vrot.lane.b32.xlu0 %v392, 127
        %v396 = vpop.permute.xlu0 %395
        %v399 = vadd.f32 %v311, %v394
        %v400 = vadd.f32 %v312, %v396
        %v401 = vstv %s334
        %v402 = vmul.f32 %v401, %v159
        %v403 = vmul.f32 %v401, %v160
        %v404 = vmul.f32 %v401, %v161
        %v408 = vrot.slane %v402, 1
        %v409 = vrot.slane %v403, 1
        %v410 = vsel %vm347, %v408, %v409
        %v411 = vrot.slane %v404, 1
        %v412 = vsel %vm347, %v409, %v411
        %413 = vrot.lane.b32.xlu0 %v410, 127
        %v414 = vpop.permute.xlu0 %413
        %415 = vrot.lane.b32.xlu0 %v412, 127
        %v416 = vpop.permute.xlu0 %415
        %v419 = vadd.f32 %v324, %v414
        %v420 = vadd.f32 %v325, %v416
        %v421 = vstv %s328
        %v422 = vmul.f32 %v421, %v156
        %v423 = vmul.f32 %v421, %v157
        %v424 = vmul.f32 %v421, %v158
        %v428 = vrot.slane %v422, 1
        %v429 = vrot.slane %v423, 1
        %v430 = vsel %vm347, %v428, %v429
        %v431 = vrot.slane %v424, 1
        %v432 = vsel %vm347, %v429, %v431
        %433 = vrot.lane.b32.xlu0 %v430, 127
        %v434 = vpop.permute.xlu0 %433
        %435 = vrot.lane.b32.xlu0 %v432, 127
        %v436 = vpop.permute.xlu0 %435
        %v439 = vadd.f32 %v359, %v434
        %v440 = vadd.f32 %v360, %v436
        %v441 = vstv %s335
        %v442 = vmul.f32 %v441, %v159
        %v443 = vmul.f32 %v441, %v160
        %v444 = vmul.f32 %v441, %v161
        %v448 = vrot.slane %v442, 1
        %v449 = vrot.slane %v443, 1
        %v450 = vsel %vm347, %v448, %v449
        %v451 = vrot.slane %v444, 1
        %v452 = vsel %vm347, %v449, %v451
        %453 = vrot.lane.b32.xlu0 %v450, 127
        %v454 = vpop.permute.xlu0 %453
        %455 = vrot.lane.b32.xlu0 %v452, 127
        %v456 = vpop.permute.xlu0 %455
        %v459 = vadd.f32 %v379, %v454
        %v460 = vadd.f32 %v380, %v456
        %v461 = vstv %s329
        %v462 = vmul.f32 %v461, %v156
        %v463 = vmul.f32 %v461, %v157
        %v464 = vmul.f32 %v461, %v158
        %v468 = vrot.slane %v462, 1
        %v469 = vrot.slane %v463, 1
        %v470 = vsel %vm347, %v468, %v469
        %v471 = vrot.slane %v464, 1
        %v472 = vsel %vm347, %v469, %v471
        %473 = vrot.lane.b32.xlu0 %v470, 125
        %v474 = vpop.permute.xlu0 %473
        %475 = vrot.lane.b32.xlu0 %v472, 125
        %v476 = vpop.permute.xlu0 %475
        %v479 = vadd.f32 %v399, %v474
        %v480 = vadd.f32 %v400, %v476
        %v481 = vstv %s336
        %v482 = vmul.f32 %v481, %v159
        %v483 = vmul.f32 %v481, %v160
        %v484 = vmul.f32 %v481, %v161
        %v488 = vrot.slane %v482, 1
        %v489 = vrot.slane %v483, 1
        %v490 = vsel %vm347, %v488, %v489
        %v491 = vrot.slane %v484, 1
        %v492 = vsel %vm347, %v489, %v491
        %493 = vrot.lane.b32.xlu0 %v490, 125
        %v494 = vpop.permute.xlu0 %493
        %495 = vrot.lane.b32.xlu0 %v492, 125
        %v496 = vpop.permute.xlu0 %495
        %v499 = vadd.f32 %v419, %v494
        %v500 = vadd.f32 %v420, %v496
        %v501 = vstv %s330
        %v502 = vmul.f32 %v501, %v156
        %v503 = vmul.f32 %v501, %v157
        %v504 = vmul.f32 %v501, %v158
        %v508 = vrot.slane %v502, 1
        %v509 = vrot.slane %v503, 1
        %v510 = vsel %vm347, %v508, %v509
        %v511 = vrot.slane %v504, 1
        %v512 = vsel %vm347, %v509, %v511
        %513 = vrot.lane.b32.xlu0 %v510, 125
        %v514 = vpop.permute.xlu0 %513
        %515 = vrot.lane.b32.xlu0 %v512, 125
        %v516 = vpop.permute.xlu0 %515
        %v519 = vadd.f32 %v439, %v514
        %v520 = vadd.f32 %v440, %v516
        %v521 = vstv %s337
        %v522 = vmul.f32 %v521, %v159
        %v523 = vmul.f32 %v521, %v160
        %v524 = vmul.f32 %v521, %v161
        %v528 = vrot.slane %v522, 1
        %v529 = vrot.slane %v523, 1
        %v530 = vsel %vm347, %v528, %v529
        %v531 = vrot.slane %v524, 1
        %v532 = vsel %vm347, %v529, %v531
        %533 = vrot.lane.b32.xlu0 %v530, 125
        %v534 = vpop.permute.xlu0 %533
        %535 = vrot.lane.b32.xlu0 %v532, 125
        %v536 = vpop.permute.xlu0 %535
        %v539 = vadd.f32 %v459, %v534
        %v540 = vadd.f32 %v460, %v536
        %v541 = vstv %s331
        %v542 = vmul.f32 %v541, %v156
        %v543 = vmul.f32 %v541, %v157
        %v544 = vmul.f32 %v541, %v158
        %v548 = vrot.slane %v542, 1
        %v549 = vrot.slane %v543, 1
        %v550 = vsel %vm347, %v548, %v549
        %v551 = vrot.slane %v544, 1
        %v552 = vsel %vm347, %v549, %v551
        %553 = vrot.lane.b32.xlu0 %v550, 123
        %v554 = vpop.permute.xlu0 %553
        %555 = vrot.lane.b32.xlu0 %v552, 123
        %v556 = vpop.permute.xlu0 %555
        %v559 = vadd.f32 %v479, %v554
        %v560 = vadd.f32 %v480, %v556
        %v561 = vstv %s338
        %v562 = vmul.f32 %v561, %v159
        %v563 = vmul.f32 %v561, %v160
        %v564 = vmul.f32 %v561, %v161
        %v568 = vrot.slane %v562, 1
        %v569 = vrot.slane %v563, 1
        %v570 = vsel %vm347, %v568, %v569
        %v571 = vrot.slane %v564, 1
        %v572 = vsel %vm347, %v569, %v571
        %573 = vrot.lane.b32.xlu0 %v570, 123
        %v574 = vpop.permute.xlu0 %573
        %575 = vrot.lane.b32.xlu0 %v572, 123
        %v576 = vpop.permute.xlu0 %575
        %v579 = vadd.f32 %v499, %v574
        %v580 = vadd.f32 %v500, %v576
        %v581 = vstv %s332
        %v582 = vmul.f32 %v581, %v156
        %v583 = vmul.f32 %v581, %v157
        %v584 = vmul.f32 %v581, %v158
        %v588 = vrot.slane %v582, 1
        %v589 = vrot.slane %v583, 1
        %v590 = vsel %vm347, %v588, %v589
        %v591 = vrot.slane %v584, 1
        %v592 = vsel %vm347, %v589, %v591
        %593 = vrot.lane.b32.xlu0 %v590, 123
        %v594 = vpop.permute.xlu0 %593
        %595 = vrot.lane.b32.xlu0 %v592, 123
        %v596 = vpop.permute.xlu0 %595
        %v599 = vadd.f32 %v519, %v594
        %v600 = vadd.f32 %v520, %v596
        %v601 = vstv %s339
        %v602 = vmul.f32 %v601, %v159
        %v603 = vmul.f32 %v601, %v160
        %v604 = vmul.f32 %v601, %v161
        %v608 = vrot.slane %v602, 1
        %v609 = vrot.slane %v603, 1
        %v610 = vsel %vm347, %v608, %v609
        %v611 = vrot.slane %v604, 1
        %v612 = vsel %vm347, %v609, %v611
        %613 = vrot.lane.b32.xlu0 %v610, 123
        %v614 = vpop.permute.xlu0 %613
        %615 = vrot.lane.b32.xlu0 %v612, 123
        %v616 = vpop.permute.xlu0 %615
        %v619 = vadd.f32 %v539, %v614
        %v620 = vadd.f32 %v540, %v616
        %s621 = sld [smem:[#allocation2 + $0xe]]
        %s622 = sld [smem:[#allocation2 + $0xf]]
        %s623 = sld [smem:[#allocation2 + $0x10]]
        %s624 = sld [smem:[#allocation2 + $0x11]]
        %s625 = sld [smem:[#allocation2 + $0x12]]
        %s626 = sld [smem:[#allocation2 + $0x13]]
        %s627 = sld [smem:[#allocation2 + $0x14]]
        %s628 = sld [smem:[#allocation2 + $0x3f]]
        %s629 = sld [smem:[#allocation2 + $0x40]]
        %s630 = sld [smem:[#allocation2 + $0x41]]
        %s631 = sld [smem:[#allocation2 + $0x42]]
        %s632 = sld [smem:[#allocation2 + $0x43]]
        %s633 = sld [smem:[#allocation2 + $0x44]]
        %s634 = sld [smem:[#allocation2 + $0x45]]
        %v635 = vstv %s621
        %v636 = vmul.f32 %v635, %v156
        %v637 = vmul.f32 %v635, %v157
        %v638 = vmul.f32 %v635, %v158
        %vm642 = vcmask 1045504
        %v643 = vrot.slane %v636, 2
        %v644 = vrot.slane %v637, 2
        %v645 = vsel %vm642, %v643, %v644
        %v646 = vrot.slane %v638, 2
        %v647 = vsel %vm642, %v644, %v646
        %v650 = vadd.f32 %v559, %v645
        %v651 = vadd.f32 %v560, %v647
        %v652 = vstv %s628
        %v653 = vmul.f32 %v652, %v159
        %v654 = vmul.f32 %v652, %v160
        %v655 = vmul.f32 %v652, %v161
        %v659 = vrot.slane %v653, 2
        %v660 = vrot.slane %v654, 2
        %v661 = vsel %vm642, %v659, %v660
        %v662 = vrot.slane %v655, 2
        %v663 = vsel %vm642, %v660, %v662
        %v666 = vadd.f32 %v579, %v661
        %v667 = vadd.f32 %v580, %v663
        %v668 = vstv %s622
        %v669 = vmul.f32 %v668, %v156
        %v670 = vmul.f32 %v668, %v157
        %v671 = vmul.f32 %v668, %v158
        %v675 = vrot.slane %v669, 2
        %v676 = vrot.slane %v670, 2
        %v677 = vsel %vm642, %v675, %v676
        %v678 = vrot.slane %v671, 2
        %v679 = vsel %vm642, %v676, %v678
        %v682 = vadd.f32 %v599, %v677
        %v683 = vadd.f32 %v600, %v679
        %v684 = vstv %s629
        %v685 = vmul.f32 %v684, %v159
        %v686 = vmul.f32 %v684, %v160
        %v687 = vmul.f32 %v684, %v161
        %v691 = vrot.slane %v685, 2
        %v692 = vrot.slane %v686, 2
        %v693 = vsel %vm642, %v691, %v692
        %v694 = vrot.slane %v687, 2
        %v695 = vsel %vm642, %v692, %v694
        %v698 = vadd.f32 %v619, %v693
        %v699 = vadd.f32 %v620, %v695
        %v700 = vstv %s623
        %v701 = vmul.f32 %v700, %v156
        %v702 = vmul.f32 %v700, %v157
        %v703 = vmul.f32 %v700, %v158
        %v707 = vrot.slane %v701, 2
        %v708 = vrot.slane %v702, 2
        %v709 = vsel %vm642, %v707, %v708
        %v710 = vrot.slane %v703, 2
        %v711 = vsel %vm642, %v708, %v710
        %712 = vrot.lane.b32.xlu0 %v709, 126
        %v713 = vpop.permute.xlu0 %712
        %714 = vrot.lane.b32.xlu0 %v711, 126
        %v715 = vpop.permute.xlu0 %714
        %v718 = vadd.f32 %v650, %v713
        %v719 = vadd.f32 %v651, %v715
        %v720 = vstv %s630
        %v721 = vmul.f32 %v720, %v159
        %v722 = vmul.f32 %v720, %v160
        %v723 = vmul.f32 %v720, %v161
        %v727 = vrot.slane %v721, 2
        %v728 = vrot.slane %v722, 2
        %v729 = vsel %vm642, %v727, %v728
        %v730 = vrot.slane %v723, 2
        %v731 = vsel %vm642, %v728, %v730
        %732 = vrot.lane.b32.xlu0 %v729, 126
        %v733 = vpop.permute.xlu0 %732
        %734 = vrot.lane.b32.xlu0 %v731, 126
        %v735 = vpop.permute.xlu0 %734
        %v738 = vadd.f32 %v666, %v733
        %v739 = vadd.f32 %v667, %v735
        %v740 = vstv %s624
        %v741 = vmul.f32 %v740, %v156
        %v742 = vmul.f32 %v740, %v157
        %v743 = vmul.f32 %v740, %v158
        %v747 = vrot.slane %v741, 2
        %v748 = vrot.slane %v742, 2
        %v749 = vsel %vm642, %v747, %v748
        %v750 = vrot.slane %v743, 2
        %v751 = vsel %vm642, %v748, %v750
        %752 = vrot.lane.b32.xlu0 %v749, 126
        %v753 = vpop.permute.xlu0 %752
        %754 = vrot.lane.b32.xlu0 %v751, 126
        %v755 = vpop.permute.xlu0 %754
        %v758 = vadd.f32 %v682, %v753
        %v759 = vadd.f32 %v683, %v755
        %v760 = vstv %s631
        %v761 = vmul.f32 %v760, %v159
        %v762 = vmul.f32 %v760, %v160
        %v763 = vmul.f32 %v760, %v161
        %v767 = vrot.slane %v761, 2
        %v768 = vrot.slane %v762, 2
        %v769 = vsel %vm642, %v767, %v768
        %v770 = vrot.slane %v763, 2
        %v771 = vsel %vm642, %v768, %v770
        %772 = vrot.lane.b32.xlu0 %v769, 126
        %v773 = vpop.permute.xlu0 %772
        %774 = vrot.lane.b32.xlu0 %v771, 126
        %v775 = vpop.permute.xlu0 %774
        %v778 = vadd.f32 %v698, %v773
        %v779 = vadd.f32 %v699, %v775
        %v780 = vstv %s625
        %v781 = vmul.f32 %v780, %v156
        %v782 = vmul.f32 %v780, %v157
        %v783 = vmul.f32 %v780, %v158
        %v787 = vrot.slane %v781, 2
        %v788 = vrot.slane %v782, 2
        %v789 = vsel %vm642, %v787, %v788
        %v790 = vrot.slane %v783, 2
        %v791 = vsel %vm642, %v788, %v790
        %792 = vrot.lane.b32.xlu0 %v789, 124
        %v793 = vpop.permute.xlu0 %792
        %794 = vrot.lane.b32.xlu0 %v791, 124
        %v795 = vpop.permute.xlu0 %794
        %v798 = vadd.f32 %v718, %v793
        %v799 = vadd.f32 %v719, %v795
        %v800 = vstv %s632
        %v801 = vmul.f32 %v800, %v159
        %v802 = vmul.f32 %v800, %v160
        %v803 = vmul.f32 %v800, %v161
        %v807 = vrot.slane %v801, 2
        %v808 = vrot.slane %v802, 2
        %v809 = vsel %vm642, %v807, %v808
        %v810 = vrot.slane %v803, 2
        %v811 = vsel %vm642, %v808, %v810
        %812 = vrot.lane.b32.xlu0 %v809, 124
        %v813 = vpop.permute.xlu0 %812
        %814 = vrot.lane.b32.xlu0 %v811, 124
        %v815 = vpop.permute.xlu0 %814
        %v818 = vadd.f32 %v738, %v813
        %v819 = vadd.f32 %v739, %v815
        %v820 = vstv %s626
        %v821 = vmul.f32 %v820, %v156
        %v822 = vmul.f32 %v820, %v157
        %v823 = vmul.f32 %v820, %v158
        %v827 = vrot.slane %v821, 2
        %v828 = vrot.slane %v822, 2
        %v829 = vsel %vm642, %v827, %v828
        %v830 = vrot.slane %v823, 2
        %v831 = vsel %vm642, %v828, %v830
        %832 = vrot.lane.b32.xlu0 %v829, 124
        %v833 = vpop.permute.xlu0 %832
        %834 = vrot.lane.b32.xlu0 %v831, 124
        %v835 = vpop.permute.xlu0 %834
        %v838 = vadd.f32 %v758, %v833
        %v839 = vadd.f32 %v759, %v835
        %v840 = vstv %s633
        %v841 = vmul.f32 %v840, %v159
        %v842 = vmul.f32 %v840, %v160
        %v843 = vmul.f32 %v840, %v161
        %v847 = vrot.slane %v841, 2
        %v848 = vrot.slane %v842, 2
        %v849 = vsel %vm642, %v847, %v848
        %v850 = vrot.slane %v843, 2
        %v851 = vsel %vm642, %v848, %v850
        %852 = vrot.lane.b32.xlu0 %v849, 124
        %v853 = vpop.permute.xlu0 %852
        %854 = vrot.lane.b32.xlu0 %v851, 124
        %v855 = vpop.permute.xlu0 %854
        %v858 = vadd.f32 %v778, %v853
        %v859 = vadd.f32 %v779, %v855
        %v860 = vstv %s627
        %v861 = vmul.f32 %v860, %v156
        %v862 = vmul.f32 %v860, %v157
        %v863 = vmul.f32 %v860, %v158
        %v867 = vrot.slane %v861, 2
        %v868 = vrot.slane %v862, 2
        %v869 = vsel %vm642, %v867, %v868
        %v870 = vrot.slane %v863, 2
        %v871 = vsel %vm642, %v868, %v870
        %872 = vrot.lane.b32.xlu0 %v869, 122
        %v873 = vpop.permute.xlu0 %872
        %874 = vrot.lane.b32.xlu0 %v871, 122
        %v875 = vpop.permute.xlu0 %874
        %v878 = vadd.f32 %v798, %v873
        %v879 = vadd.f32 %v799, %v875
        %v880 = vstv %s634
        %v881 = vmul.f32 %v880, %v159
        %v882 = vmul.f32 %v880, %v160
        %v883 = vmul.f32 %v880, %v161
        %v887 = vrot.slane %v881, 2
        %v888 = vrot.slane %v882, 2
        %v889 = vsel %vm642, %v887, %v888
        %v890 = vrot.slane %v883, 2
        %v891 = vsel %vm642, %v888, %v890
        %892 = vrot.lane.b32.xlu0 %v889, 122
        %v893 = vpop.permute.xlu0 %892
        %894 = vrot.lane.b32.xlu0 %v891, 122
        %v895 = vpop.permute.xlu0 %894
        %v898 = vadd.f32 %v818, %v893
        %v899 = vadd.f32 %v819, %v895
        %s900 = sld [smem:[#allocation2 + $0x15]]
        %s901 = sld [smem:[#allocation2 + $0x16]]
        %s902 = sld [smem:[#allocation2 + $0x17]]
        %s903 = sld [smem:[#allocation2 + $0x18]]
        %s904 = sld [smem:[#allocation2 + $0x19]]
        %s905 = sld [smem:[#allocation2 + $0x1a]]
        %s906 = sld [smem:[#allocation2 + $0x1b]]
        %s907 = sld [smem:[#allocation2 + $0x46]]
        %s908 = sld [smem:[#allocation2 + $0x47]]
        %s909 = sld [smem:[#allocation2 + $0x48]]
        %s910 = sld [smem:[#allocation2 + $0x49]]
        %s911 = sld [smem:[#allocation2 + $0x4a]]
        %s912 = sld [smem:[#allocation2 + $0x4b]]
        %s913 = sld [smem:[#allocation2 + $0x4c]]
        %v914 = vstv %s900
        %v915 = vmul.f32 %v914, %v156
        %v916 = vmul.f32 %v914, %v157
        %v917 = vmul.f32 %v914, %v158
        %vm921 = vcmask 1044480
        %v922 = vrot.slane %v915, 3
        %v923 = vrot.slane %v916, 3
        %v924 = vsel %vm921, %v922, %v923
        %v925 = vrot.slane %v917, 3
        %v926 = vsel %vm921, %v923, %v925
        %927 = vrot.lane.b32.xlu0 %v924, 1
        %v928 = vpop.permute.xlu0 %927
        %929 = vrot.lane.b32.xlu0 %v926, 1
        %v930 = vpop.permute.xlu0 %929
        %v933 = vadd.f32 %v838, %v928
        %v934 = vadd.f32 %v839, %v930
        %v935 = vstv %s907
        %v936 = vmul.f32 %v935, %v159
        %v937 = vmul.f32 %v935, %v160
        %v938 = vmul.f32 %v935, %v161
        %v942 = vrot.slane %v936, 3
        %v943 = vrot.slane %v937, 3
        %v944 = vsel %vm921, %v942, %v943
        %v945 = vrot.slane %v938, 3
        %v946 = vsel %vm921, %v943, %v945
        %947 = vrot.lane.b32.xlu0 %v944, 1
        %v948 = vpop.permute.xlu0 %947
        %949 = vrot.lane.b32.xlu0 %v946, 1
        %v950 = vpop.permute.xlu0 %949
        %v953 = vadd.f32 %v858, %v948
        %v954 = vadd.f32 %v859, %v950
        %v955 = vstv %s901
        %v956 = vmul.f32 %v955, %v156
        %v957 = vmul.f32 %v955, %v157
        %v958 = vmul.f32 %v955, %v158
        %v962 = vrot.slane %v956, 3
        %v963 = vrot.slane %v957, 3
        %v964 = vsel %vm921, %v962, %v963
        %v965 = vrot.slane %v958, 3
        %v966 = vsel %vm921, %v963, %v965
        %967 = vrot.lane.b32.xlu0 %v964, 127
        %v968 = vpop.permute.xlu0 %967
        %969 = vrot.lane.b32.xlu0 %v966, 127
        %v970 = vpop.permute.xlu0 %969
        %v973 = vadd.f32 %v878, %v968
        %v974 = vadd.f32 %v879, %v970
        %v975 = vstv %s908
        %v976 = vmul.f32 %v975, %v159
        %v977 = vmul.f32 %v975, %v160
        %v978 = vmul.f32 %v975, %v161
        %v982 = vrot.slane %v976, 3
        %v983 = vrot.slane %v977, 3
        %v984 = vsel %vm921, %v982, %v983
        %v985 = vrot.slane %v978, 3
        %v986 = vsel %vm921, %v983, %v985
        %987 = vrot.lane.b32.xlu0 %v984, 127
        %v988 = vpop.permute.xlu0 %987
        %989 = vrot.lane.b32.xlu0 %v986, 127
        %v990 = vpop.permute.xlu0 %989
        %v993 = vadd.f32 %v898, %v988
        %v994 = vadd.f32 %v899, %v990
        %v995 = vstv %s902
        %v996 = vmul.f32 %v995, %v156
        %v997 = vmul.f32 %v995, %v157
        %v998 = vmul.f32 %v995, %v158
        %v1002 = vrot.slane %v996, 3
        %v1003 = vrot.slane %v997, 3
        %v1004 = vsel %vm921, %v1002, %v1003
        %v1005 = vrot.slane %v998, 3
        %v1006 = vsel %vm921, %v1003, %v1005
        %1007 = vrot.lane.b32.xlu0 %v1004, 127
        %v1008 = vpop.permute.xlu0 %1007
        %1009 = vrot.lane.b32.xlu0 %v1006, 127
        %v1010 = vpop.permute.xlu0 %1009
        %v1013 = vadd.f32 %v933, %v1008
        %v1014 = vadd.f32 %v934, %v1010
        %v1015 = vstv %s909
        %v1016 = vmul.f32 %v1015, %v159
        %v1017 = vmul.f32 %v1015, %v160
        %v1018 = vmul.f32 %v1015, %v161
        %v1022 = vrot.slane %v1016, 3
        %v1023 = vrot.slane %v1017, 3
        %v1024 = vsel %vm921, %v1022, %v1023
        %v1025 = vrot.slane %v1018, 3
        %v1026 = vsel %vm921, %v1023, %v1025
        %1027 = vrot.lane.b32.xlu0 %v1024, 127
        %v1028 = vpop.permute.xlu0 %1027
        %1029 = vrot.lane.b32.xlu0 %v1026, 127
        %v1030 = vpop.permute.xlu0 %1029
        %v1033 = vadd.f32 %v953, %v1028
        %v1034 = vadd.f32 %v954, %v1030
        %v1035 = vstv %s903
        %v1036 = vmul.f32 %v1035, %v156
        %v1037 = vmul.f32 %v1035, %v157
        %v1038 = vmul.f32 %v1035, %v158
        %v1042 = vrot.slane %v1036, 3
        %v1043 = vrot.slane %v1037, 3
        %v1044 = vsel %vm921, %v1042, %v1043
        %v1045 = vrot.slane %v1038, 3
        %v1046 = vsel %vm921, %v1043, %v1045
        %1047 = vrot.lane.b32.xlu0 %v1044, 125
        %v1048 = vpop.permute.xlu0 %1047
        %1049 = vrot.lane.b32.xlu0 %v1046, 125
        %v1050 = vpop.permute.xlu0 %1049
        %v1053 = vadd.f32 %v973, %v1048
        %v1054 = vadd.f32 %v974, %v1050
        %v1055 = vstv %s910
        %v1056 = vmul.f32 %v1055, %v159
        %v1057 = vmul.f32 %v1055, %v160
        %v1058 = vmul.f32 %v1055, %v161
        %v1062 = vrot.slane %v1056, 3
        %v1063 = vrot.slane %v1057, 3
        %v1064 = vsel %vm921, %v1062, %v1063
        %v1065 = vrot.slane %v1058, 3
        %v1066 = vsel %vm921, %v1063, %v1065
        %1067 = vrot.lane.b32.xlu0 %v1064, 125
        %v1068 = vpop.permute.xlu0 %1067
        %1069 = vrot.lane.b32.xlu0 %v1066, 125
        %v1070 = vpop.permute.xlu0 %1069
        %v1073 = vadd.f32 %v993, %v1068
        %v1074 = vadd.f32 %v994, %v1070
        %v1075 = vstv %s904
        %v1076 = vmul.f32 %v1075, %v156
        %v1077 = vmul.f32 %v1075, %v157
        %v1078 = vmul.f32 %v1075, %v158
        %v1082 = vrot.slane %v1076, 3
        %v1083 = vrot.slane %v1077, 3
        %v1084 = vsel %vm921, %v1082, %v1083
        %v1085 = vrot.slane %v1078, 3
        %v1086 = vsel %vm921, %v1083, %v1085
        %1087 = vrot.lane.b32.xlu0 %v1084, 125
        %v1088 = vpop.permute.xlu0 %1087
        %1089 = vrot.lane.b32.xlu0 %v1086, 125
        %v1090 = vpop.permute.xlu0 %1089
        %v1093 = vadd.f32 %v1013, %v1088
        %v1094 = vadd.f32 %v1014, %v1090
        %v1095 = vstv %s911
        %v1096 = vmul.f32 %v1095, %v159
        %v1097 = vmul.f32 %v1095, %v160
        %v1098 = vmul.f32 %v1095, %v161
        %v1102 = vrot.slane %v1096, 3
        %v1103 = vrot.slane %v1097, 3
        %v1104 = vsel %vm921, %v1102, %v1103
        %v1105 = vrot.slane %v1098, 3
        %v1106 = vsel %vm921, %v1103, %v1105
        %1107 = vrot.lane.b32.xlu0 %v1104, 125
        %v1108 = vpop.permute.xlu0 %1107
        %1109 = vrot.lane.b32.xlu0 %v1106, 125
        %v1110 = vpop.permute.xlu0 %1109
        %v1113 = vadd.f32 %v1033, %v1108
        %v1114 = vadd.f32 %v1034, %v1110
        %v1115 = vstv %s905
        %v1116 = vmul.f32 %v1115, %v156
        %v1117 = vmul.f32 %v1115, %v157
        %v1118 = vmul.f32 %v1115, %v158
        %v1122 = vrot.slane %v1116, 3
        %v1123 = vrot.slane %v1117, 3
        %v1124 = vsel %vm921, %v1122, %v1123
        %v1125 = vrot.slane %v1118, 3
        %v1126 = vsel %vm921, %v1123, %v1125
        %1127 = vrot.lane.b32.xlu0 %v1124, 123
        %v1128 = vpop.permute.xlu0 %1127
        %1129 = vrot.lane.b32.xlu0 %v1126, 123
        %v1130 = vpop.permute.xlu0 %1129
        %v1133 = vadd.f32 %v1053, %v1128
        %v1134 = vadd.f32 %v1054, %v1130
        %v1135 = vstv %s912
        %v1136 = vmul.f32 %v1135, %v159
        %v1137 = vmul.f32 %v1135, %v160
        %v1138 = vmul.f32 %v1135, %v161
        %v1142 = vrot.slane %v1136, 3
        %v1143 = vrot.slane %v1137, 3
        %v1144 = vsel %vm921, %v1142, %v1143
        %v1145 = vrot.slane %v1138, 3
        %v1146 = vsel %vm921, %v1143, %v1145
        %1147 = vrot.lane.b32.xlu0 %v1144, 123
        %v1148 = vpop.permute.xlu0 %1147
        %1149 = vrot.lane.b32.xlu0 %v1146, 123
        %v1150 = vpop.permute.xlu0 %1149
        %v1153 = vadd.f32 %v1073, %v1148
        %v1154 = vadd.f32 %v1074, %v1150
        %v1155 = vstv %s906
        %v1156 = vmul.f32 %v1155, %v156
        %v1157 = vmul.f32 %v1155, %v157
        %v1158 = vmul.f32 %v1155, %v158
        %v1162 = vrot.slane %v1156, 3
        %v1163 = vrot.slane %v1157, 3
        %v1164 = vsel %vm921, %v1162, %v1163
        %v1165 = vrot.slane %v1158, 3
        %v1166 = vsel %vm921, %v1163, %v1165
        %1167 = vrot.lane.b32.xlu0 %v1164, 123
        %v1168 = vpop.permute.xlu0 %1167
        %1169 = vrot.lane.b32.xlu0 %v1166, 123
        %v1170 = vpop.permute.xlu0 %1169
        %v1173 = vadd.f32 %v1093, %v1168
        %v1174 = vadd.f32 %v1094, %v1170
        %v1175 = vstv %s913
        %v1176 = vmul.f32 %v1175, %v159
        %v1177 = vmul.f32 %v1175, %v160
        %v1178 = vmul.f32 %v1175, %v161
        %v1182 = vrot.slane %v1176, 3
        %v1183 = vrot.slane %v1177, 3
        %v1184 = vsel %vm921, %v1182, %v1183
        %v1185 = vrot.slane %v1178, 3
        %v1186 = vsel %vm921, %v1183, %v1185
        %1187 = vrot.lane.b32.xlu0 %v1184, 123
        %v1188 = vpop.permute.xlu0 %1187
        %1189 = vrot.lane.b32.xlu0 %v1186, 123
        %v1190 = vpop.permute.xlu0 %1189
        %v1193 = vadd.f32 %v1113, %v1188
        %v1194 = vadd.f32 %v1114, %v1190
        %s1195 = sld [smem:[#allocation2 + $0x1c]]
        %s1196 = sld [smem:[#allocation2 + $0x1d]]
        %s1197 = sld [smem:[#allocation2 + $0x1e]]
        %s1198 = sld [smem:[#allocation2 + $0x1f]]
        %s1199 = sld [smem:[#allocation2 + $0x20]]
        %s1200 = sld [smem:[#allocation2 + $0x21]]
        %s1201 = sld [smem:[#allocation2 + $0x22]]
        %s1202 = sld [smem:[#allocation2 + $0x4d]]
        %s1203 = sld [smem:[#allocation2 + $0x4e]]
        %s1204 = sld [smem:[#allocation2 + $0x4f]]
        %s1205 = sld [smem:[#allocation2 + $0x50]]
        %s1206 = sld [smem:[#allocation2 + $0x51]]
        %s1207 = sld [smem:[#allocation2 + $0x52]]
        %s1208 = sld [smem:[#allocation2 + $0x53]]
        %v1209 = vstv %s1195
        %v1210 = vmul.f32 %v1209, %v156
        %v1211 = vmul.f32 %v1209, %v157
        %v1212 = vmul.f32 %v1209, %v158
        %vm1216 = vcmask 1043456
        %v1217 = vrot.slane %v1210, 4
        %v1218 = vrot.slane %v1211, 4
        %v1219 = vsel %vm1216, %v1217, %v1218
        %v1220 = vrot.slane %v1212, 4
        %v1221 = vsel %vm1216, %v1218, %v1220
        %v1224 = vadd.f32 %v1133, %v1219
        %v1225 = vadd.f32 %v1134, %v1221
        %v1226 = vstv %s1202
        %v1227 = vmul.f32 %v1226, %v159
        %v1228 = vmul.f32 %v1226, %v160
        %v1229 = vmul.f32 %v1226, %v161
        %v1233 = vrot.slane %v1227, 4
        %v1234 = vrot.slane %v1228, 4
        %v1235 = vsel %vm1216, %v1233, %v1234
        %v1236 = vrot.slane %v1229, 4
        %v1237 = vsel %vm1216, %v1234, %v1236
        %v1240 = vadd.f32 %v1153, %v1235
        %v1241 = vadd.f32 %v1154, %v1237
        %v1242 = vstv %s1196
        %v1243 = vmul.f32 %v1242, %v156
        %v1244 = vmul.f32 %v1242, %v157
        %v1245 = vmul.f32 %v1242, %v158
        %v1249 = vrot.slane %v1243, 4
        %v1250 = vrot.slane %v1244, 4
        %v1251 = vsel %vm1216, %v1249, %v1250
        %v1252 = vrot.slane %v1245, 4
        %v1253 = vsel %vm1216, %v1250, %v1252
        %v1256 = vadd.f32 %v1173, %v1251
        %v1257 = vadd.f32 %v1174, %v1253
        %v1258 = vstv %s1203
        %v1259 = vmul.f32 %v1258, %v159
        %v1260 = vmul.f32 %v1258, %v160
        %v1261 = vmul.f32 %v1258, %v161
        %v1265 = vrot.slane %v1259, 4
        %v1266 = vrot.slane %v1260, 4
        %v1267 = vsel %vm1216, %v1265, %v1266
        %v1268 = vrot.slane %v1261, 4
        %v1269 = vsel %vm1216, %v1266, %v1268
        %v1272 = vadd.f32 %v1193, %v1267
        %v1273 = vadd.f32 %v1194, %v1269
        %v1274 = vstv %s1197
        %v1275 = vmul.f32 %v1274, %v156
        %v1276 = vmul.f32 %v1274, %v157
        %v1277 = vmul.f32 %v1274, %v158
        %v1281 = vrot.slane %v1275, 4
        %v1282 = vrot.slane %v1276, 4
        %v1283 = vsel %vm1216, %v1281, %v1282
        %v1284 = vrot.slane %v1277, 4
        %v1285 = vsel %vm1216, %v1282, %v1284
        %1286 = vrot.lane.b32.xlu0 %v1283, 126
        %v1287 = vpop.permute.xlu0 %1286
        %1288 = vrot.lane.b32.xlu0 %v1285, 126
        %v1289 = vpop.permute.xlu0 %1288
        %v1292 = vadd.f32 %v1224, %v1287
        %v1293 = vadd.f32 %v1225, %v1289
        %v1294 = vstv %s1204
        %v1295 = vmul.f32 %v1294, %v159
        %v1296 = vmul.f32 %v1294, %v160
        %v1297 = vmul.f32 %v1294, %v161
        %v1301 = vrot.slane %v1295, 4
        %v1302 = vrot.slane %v1296, 4
        %v1303 = vsel %vm1216, %v1301, %v1302
        %v1304 = vrot.slane %v1297, 4
        %v1305 = vsel %vm1216, %v1302, %v1304
        %1306 = vrot.lane.b32.xlu0 %v1303, 126
        %v1307 = vpop.permute.xlu0 %1306
        %1308 = vrot.lane.b32.xlu0 %v1305, 126
        %v1309 = vpop.permute.xlu0 %1308
        %v1312 = vadd.f32 %v1240, %v1307
        %v1313 = vadd.f32 %v1241, %v1309
        %v1314 = vstv %s1198
        %v1315 = vmul.f32 %v1314, %v156
        %v1316 = vmul.f32 %v1314, %v157
        %v1317 = vmul.f32 %v1314, %v158
        %v1321 = vrot.slane %v1315, 4
        %v1322 = vrot.slane %v1316, 4
        %v1323 = vsel %vm1216, %v1321, %v1322
        %v1324 = vrot.slane %v1317, 4
        %v1325 = vsel %vm1216, %v1322, %v1324
        %1326 = vrot.lane.b32.xlu0 %v1323, 126
        %v1327 = vpop.permute.xlu0 %1326
        %1328 = vrot.lane.b32.xlu0 %v1325, 126
        %v1329 = vpop.permute.xlu0 %1328
        %v1332 = vadd.f32 %v1256, %v1327
        %v1333 = vadd.f32 %v1257, %v1329
        %v1334 = vstv %s1205
        %v1335 = vmul.f32 %v1334, %v159
        %v1336 = vmul.f32 %v1334, %v160
        %v1337 = vmul.f32 %v1334, %v161
        %v1341 = vrot.slane %v1335, 4
        %v1342 = vrot.slane %v1336, 4
        %v1343 = vsel %vm1216, %v1341, %v1342
        %v1344 = vrot.slane %v1337, 4
        %v1345 = vsel %vm1216, %v1342, %v1344
        %1346 = vrot.lane.b32.xlu0 %v1343, 126
        %v1347 = vpop.permute.xlu0 %1346
        %1348 = vrot.lane.b32.xlu0 %v1345, 126
        %v1349 = vpop.permute.xlu0 %1348
        %v1352 = vadd.f32 %v1272, %v1347
        %v1353 = vadd.f32 %v1273, %v1349
        %v1354 = vstv %s1199
        %v1355 = vmul.f32 %v1354, %v156
        %v1356 = vmul.f32 %v1354, %v157
        %v1357 = vmul.f32 %v1354, %v158
        %v1361 = vrot.slane %v1355, 4
        %v1362 = vrot.slane %v1356, 4
        %v1363 = vsel %vm1216, %v1361, %v1362
        %v1364 = vrot.slane %v1357, 4
        %v1365 = vsel %vm1216, %v1362, %v1364
        %1366 = vrot.lane.b32.xlu0 %v1363, 124
        %v1367 = vpop.permute.xlu0 %1366
        %1368 = vrot.lane.b32.xlu0 %v1365, 124
        %v1369 = vpop.permute.xlu0 %1368
        %v1372 = vadd.f32 %v1292, %v1367
        %v1373 = vadd.f32 %v1293, %v1369
        %v1374 = vstv %s1206
        %v1375 = vmul.f32 %v1374, %v159
        %v1376 = vmul.f32 %v1374, %v160
        %v1377 = vmul.f32 %v1374, %v161
        %v1381 = vrot.slane %v1375, 4
        %v1382 = vrot.slane %v1376, 4
        %v1383 = vsel %vm1216, %v1381, %v1382
        %v1384 = vrot.slane %v1377, 4
        %v1385 = vsel %vm1216, %v1382, %v1384
        %1386 = vrot.lane.b32.xlu0 %v1383, 124
        %v1387 = vpop.permute.xlu0 %1386
        %1388 = vrot.lane.b32.xlu0 %v1385, 124
        %v1389 = vpop.permute.xlu0 %1388
        %v1392 = vadd.f32 %v1312, %v1387
        %v1393 = vadd.f32 %v1313, %v1389
        %v1394 = vstv %s1200
        %v1395 = vmul.f32 %v1394, %v156
        %v1396 = vmul.f32 %v1394, %v157
        %v1397 = vmul.f32 %v1394, %v158
        %v1401 = vrot.slane %v1395, 4
        %v1402 = vrot.slane %v1396, 4
        %v1403 = vsel %vm1216, %v1401, %v1402
        %v1404 = vrot.slane %v1397, 4
        %v1405 = vsel %vm1216, %v1402, %v1404
        %1406 = vrot.lane.b32.xlu0 %v1403, 124
        %v1407 = vpop.permute.xlu0 %1406
        %1408 = vrot.lane.b32.xlu0 %v1405, 124
        %v1409 = vpop.permute.xlu0 %1408
        %v1412 = vadd.f32 %v1332, %v1407
        %v1413 = vadd.f32 %v1333, %v1409
        %v1414 = vstv %s1207
        %v1415 = vmul.f32 %v1414, %v159
        %v1416 = vmul.f32 %v1414, %v160
        %v1417 = vmul.f32 %v1414, %v161
        %v1421 = vrot.slane %v1415, 4
        %v1422 = vrot.slane %v1416, 4
        %v1423 = vsel %vm1216, %v1421, %v1422
        %v1424 = vrot.slane %v1417, 4
        %v1425 = vsel %vm1216, %v1422, %v1424
        %1426 = vrot.lane.b32.xlu0 %v1423, 124
        %v1427 = vpop.permute.xlu0 %1426
        %1428 = vrot.lane.b32.xlu0 %v1425, 124
        %v1429 = vpop.permute.xlu0 %1428
        %v1432 = vadd.f32 %v1352, %v1427
        %v1433 = vadd.f32 %v1353, %v1429
        %v1434 = vstv %s1201
        %v1435 = vmul.f32 %v1434, %v156
        %v1436 = vmul.f32 %v1434, %v157
        %v1437 = vmul.f32 %v1434, %v158
        %v1441 = vrot.slane %v1435, 4
        %v1442 = vrot.slane %v1436, 4
        %v1443 = vsel %vm1216, %v1441, %v1442
        %v1444 = vrot.slane %v1437, 4
        %v1445 = vsel %vm1216, %v1442, %v1444
        %1446 = vrot.lane.b32.xlu0 %v1443, 122
        %v1447 = vpop.permute.xlu0 %1446
        %1448 = vrot.lane.b32.xlu0 %v1445, 122
        %v1449 = vpop.permute.xlu0 %1448
        %v1452 = vadd.f32 %v1372, %v1447
        %v1453 = vadd.f32 %v1373, %v1449
        %v1454 = vstv %s1208
        %v1455 = vmul.f32 %v1454, %v159
        %v1456 = vmul.f32 %v1454, %v160
        %v1457 = vmul.f32 %v1454, %v161
        %v1461 = vrot.slane %v1455, 4
        %v1462 = vrot.slane %v1456, 4
        %v1463 = vsel %vm1216, %v1461, %v1462
        %v1464 = vrot.slane %v1457, 4
        %v1465 = vsel %vm1216, %v1462, %v1464
        %1466 = vrot.lane.b32.xlu0 %v1463, 122
        %v1467 = vpop.permute.xlu0 %1466
        %1468 = vrot.lane.b32.xlu0 %v1465, 122
        %v1469 = vpop.permute.xlu0 %1468
        %v1472 = vadd.f32 %v1392, %v1467
        %v1473 = vadd.f32 %v1393, %v1469
        %s1474 = sld [smem:[#allocation2 + $0x23]]
        %s1475 = sld [smem:[#allocation2 + $0x24]]
        %s1476 = sld [smem:[#allocation2 + $0x25]]
        %s1477 = sld [smem:[#allocation2 + $0x26]]
        %s1478 = sld [smem:[#allocation2 + $0x27]]
        %s1479 = sld [smem:[#allocation2 + $0x28]]
        %s1480 = sld [smem:[#allocation2 + $0x29]]
        %s1481 = sld [smem:[#allocation2 + $0x54]]
        %s1482 = sld [smem:[#allocation2 + $0x55]]
        %s1483 = sld [smem:[#allocation2 + $0x56]]
        %s1484 = sld [smem:[#allocation2 + $0x57]]
        %s1485 = sld [smem:[#allocation2 + $0x58]]
        %s1486 = sld [smem:[#allocation2 + $0x59]]
        %s1487 = sld [smem:[#allocation2 + $0x5a]]
        %v1488 = vstv %s1474
        %v1489 = vmul.f32 %v1488, %v156
        %v1490 = vmul.f32 %v1488, %v157
        %v1491 = vmul.f32 %v1488, %v158
        %vm1495 = vcmask 1042432
        %v1496 = vrot.slane %v1489, 5
        %v1497 = vrot.slane %v1490, 5
        %v1498 = vsel %vm1495, %v1496, %v1497
        %v1499 = vrot.slane %v1491, 5
        %v1500 = vsel %vm1495, %v1497, %v1499
        %1501 = vrot.lane.b32.xlu0 %v1498, 1
        %v1502 = vpop.permute.xlu0 %1501
        %1503 = vrot.lane.b32.xlu0 %v1500, 1
        %v1504 = vpop.permute.xlu0 %1503
        %v1507 = vadd.f32 %v1412, %v1502
        %v1508 = vadd.f32 %v1413, %v1504
        %v1509 = vstv %s1481
        %v1510 = vmul.f32 %v1509, %v159
        %v1511 = vmul.f32 %v1509, %v160
        %v1512 = vmul.f32 %v1509, %v161
        %v1516 = vrot.slane %v1510, 5
        %v1517 = vrot.slane %v1511, 5
        %v1518 = vsel %vm1495, %v1516, %v1517
        %v1519 = vrot.slane %v1512, 5
        %v1520 = vsel %vm1495, %v1517, %v1519
        %1521 = vrot.lane.b32.xlu0 %v1518, 1
        %v1522 = vpop.permute.xlu0 %1521
        %1523 = vrot.lane.b32.xlu0 %v1520, 1
        %v1524 = vpop.permute.xlu0 %1523
        %v1527 = vadd.f32 %v1432, %v1522
        %v1528 = vadd.f32 %v1433, %v1524
        %v1529 = vstv %s1475
        %v1530 = vmul.f32 %v1529, %v156
        %v1531 = vmul.f32 %v1529, %v157
        %v1532 = vmul.f32 %v1529, %v158
        %v1536 = vrot.slane %v1530, 5
        %v1537 = vrot.slane %v1531, 5
        %v1538 = vsel %vm1495, %v1536, %v1537
        %v1539 = vrot.slane %v1532, 5
        %v1540 = vsel %vm1495, %v1537, %v1539
        %1541 = vrot.lane.b32.xlu0 %v1538, 127
        %v1542 = vpop.permute.xlu0 %1541
        %1543 = vrot.lane.b32.xlu0 %v1540, 127
        %v1544 = vpop.permute.xlu0 %1543
        %v1547 = vadd.f32 %v1452, %v1542
        %v1548 = vadd.f32 %v1453, %v1544
        %v1549 = vstv %s1482
        %v1550 = vmul.f32 %v1549, %v159
        %v1551 = vmul.f32 %v1549, %v160
        %v1552 = vmul.f32 %v1549, %v161
        %v1556 = vrot.slane %v1550, 5
        %v1557 = vrot.slane %v1551, 5
        %v1558 = vsel %vm1495, %v1556, %v1557
        %v1559 = vrot.slane %v1552, 5
        %v1560 = vsel %vm1495, %v1557, %v1559
        %1561 = vrot.lane.b32.xlu0 %v1558, 127
        %v1562 = vpop.permute.xlu0 %1561
        %1563 = vrot.lane.b32.xlu0 %v1560, 127
        %v1564 = vpop.permute.xlu0 %1563
        %v1567 = vadd.f32 %v1472, %v1562
        %v1568 = vadd.f32 %v1473, %v1564
        %v1569 = vstv %s1476
        %v1570 = vmul.f32 %v1569, %v156
        %v1571 = vmul.f32 %v1569, %v157
        %v1572 = vmul.f32 %v1569, %v158
        %v1576 = vrot.slane %v1570, 5
        %v1577 = vrot.slane %v1571, 5
        %v1578 = vsel %vm1495, %v1576, %v1577
        %v1579 = vrot.slane %v1572, 5
        %v1580 = vsel %vm1495, %v1577, %v1579
        %1581 = vrot.lane.b32.xlu0 %v1578, 127
        %v1582 = vpop.permute.xlu0 %1581
        %1583 = vrot.lane.b32.xlu0 %v1580, 127
        %v1584 = vpop.permute.xlu0 %1583
        %v1587 = vadd.f32 %v1507, %v1582
        %v1588 = vadd.f32 %v1508, %v1584
        %v1589 = vstv %s1483
        %v1590 = vmul.f32 %v1589, %v159
        %v1591 = vmul.f32 %v1589, %v160
        %v1592 = vmul.f32 %v1589, %v161
        %v1596 = vrot.slane %v1590, 5
        %v1597 = vrot.slane %v1591, 5
        %v1598 = vsel %vm1495, %v1596, %v1597
        %v1599 = vrot.slane %v1592, 5
        %v1600 = vsel %vm1495, %v1597, %v1599
        %1601 = vrot.lane.b32.xlu0 %v1598, 127
        %v1602 = vpop.permute.xlu0 %1601
        %1603 = vrot.lane.b32.xlu0 %v1600, 127
        %v1604 = vpop.permute.xlu0 %1603
        %v1607 = vadd.f32 %v1527, %v1602
        %v1608 = vadd.f32 %v1528, %v1604
        %v1609 = vstv %s1477
        %v1610 = vmul.f32 %v1609, %v156
        %v1611 = vmul.f32 %v1609, %v157
        %v1612 = vmul.f32 %v1609, %v158
        %v1616 = vrot.slane %v1610, 5
        %v1617 = vrot.slane %v1611, 5
        %v1618 = vsel %vm1495, %v1616, %v1617
        %v1619 = vrot.slane %v1612, 5
        %v1620 = vsel %vm1495, %v1617, %v1619
        %1621 = vrot.lane.b32.xlu0 %v1618, 125
        %v1622 = vpop.permute.xlu0 %1621
        %1623 = vrot.lane.b32.xlu0 %v1620, 125
        %v1624 = vpop.permute.xlu0 %1623
        %v1627 = vadd.f32 %v1547, %v1622
        %v1628 = vadd.f32 %v1548, %v1624
        %v1629 = vstv %s1484
        %v1630 = vmul.f32 %v1629, %v159
        %v1631 = vmul.f32 %v1629, %v160
        %v1632 = vmul.f32 %v1629, %v161
        %v1636 = vrot.slane %v1630, 5
        %v1637 = vrot.slane %v1631, 5
        %v1638 = vsel %vm1495, %v1636, %v1637
        %v1639 = vrot.slane %v1632, 5
        %v1640 = vsel %vm1495, %v1637, %v1639
        %1641 = vrot.lane.b32.xlu0 %v1638, 125
        %v1642 = vpop.permute.xlu0 %1641
        %1643 = vrot.lane.b32.xlu0 %v1640, 125
        %v1644 = vpop.permute.xlu0 %1643
        %v1647 = vadd.f32 %v1567, %v1642
        %v1648 = vadd.f32 %v1568, %v1644
        %v1649 = vstv %s1478
        %v1650 = vmul.f32 %v1649, %v156
        %v1651 = vmul.f32 %v1649, %v157
        %v1652 = vmul.f32 %v1649, %v158
        %v1656 = vrot.slane %v1650, 5
        %v1657 = vrot.slane %v1651, 5
        %v1658 = vsel %vm1495, %v1656, %v1657
        %v1659 = vrot.slane %v1652, 5
        %v1660 = vsel %vm1495, %v1657, %v1659
        %1661 = vrot.lane.b32.xlu0 %v1658, 125
        %v1662 = vpop.permute.xlu0 %1661
        %1663 = vrot.lane.b32.xlu0 %v1660, 125
        %v1664 = vpop.permute.xlu0 %1663
        %v1667 = vadd.f32 %v1587, %v1662
        %v1668 = vadd.f32 %v1588, %v1664
        %v1669 = vstv %s1485
        %v1670 = vmul.f32 %v1669, %v159
        %v1671 = vmul.f32 %v1669, %v160
        %v1672 = vmul.f32 %v1669, %v161
        %v1676 = vrot.slane %v1670, 5
        %v1677 = vrot.slane %v1671, 5
        %v1678 = vsel %vm1495, %v1676, %v1677
        %v1679 = vrot.slane %v1672, 5
        %v1680 = vsel %vm1495, %v1677, %v1679
        %1681 = vrot.lane.b32.xlu0 %v1678, 125
        %v1682 = vpop.permute.xlu0 %1681
        %1683 = vrot.lane.b32.xlu0 %v1680, 125
        %v1684 = vpop.permute.xlu0 %1683
        %v1687 = vadd.f32 %v1607, %v1682
        %v1688 = vadd.f32 %v1608, %v1684
        %v1689 = vstv %s1479
        %v1690 = vmul.f32 %v1689, %v156
        %v1691 = vmul.f32 %v1689, %v157
        %v1692 = vmul.f32 %v1689, %v158
        %v1696 = vrot.slane %v1690, 5
        %v1697 = vrot.slane %v1691, 5
        %v1698 = vsel %vm1495, %v1696, %v1697
        %v1699 = vrot.slane %v1692, 5
        %v1700 = vsel %vm1495, %v1697, %v1699
        %1701 = vrot.lane.b32.xlu0 %v1698, 123
        %v1702 = vpop.permute.xlu0 %1701
        %1703 = vrot.lane.b32.xlu0 %v1700, 123
        %v1704 = vpop.permute.xlu0 %1703
        %v1707 = vadd.f32 %v1627, %v1702
        %v1708 = vadd.f32 %v1628, %v1704
        %v1709 = vstv %s1486
        %v1710 = vmul.f32 %v1709, %v159
        %v1711 = vmul.f32 %v1709, %v160
        %v1712 = vmul.f32 %v1709, %v161
        %v1716 = vrot.slane %v1710, 5
        %v1717 = vrot.slane %v1711, 5
        %v1718 = vsel %vm1495, %v1716, %v1717
        %v1719 = vrot.slane %v1712, 5
        %v1720 = vsel %vm1495, %v1717, %v1719
        %1721 = vrot.lane.b32.xlu0 %v1718, 123
        %v1722 = vpop.permute.xlu0 %1721
        %1723 = vrot.lane.b32.xlu0 %v1720, 123
        %v1724 = vpop.permute.xlu0 %1723
        %v1727 = vadd.f32 %v1647, %v1722
        %v1728 = vadd.f32 %v1648, %v1724
        %v1729 = vstv %s1480
        %v1730 = vmul.f32 %v1729, %v156
        %v1731 = vmul.f32 %v1729, %v157
        %v1732 = vmul.f32 %v1729, %v158
        %v1736 = vrot.slane %v1730, 5
        %v1737 = vrot.slane %v1731, 5
        %v1738 = vsel %vm1495, %v1736, %v1737
        %v1739 = vrot.slane %v1732, 5
        %v1740 = vsel %vm1495, %v1737, %v1739
        %1741 = vrot.lane.b32.xlu0 %v1738, 123
        %v1742 = vpop.permute.xlu0 %1741
        %1743 = vrot.lane.b32.xlu0 %v1740, 123
        %v1744 = vpop.permute.xlu0 %1743
        %v1747 = vadd.f32 %v1667, %v1742
        %v1748 = vadd.f32 %v1668, %v1744
        %v1749 = vstv %s1487
        %v1750 = vmul.f32 %v1749, %v159
        %v1751 = vmul.f32 %v1749, %v160
        %v1752 = vmul.f32 %v1749, %v161
        %v1756 = vrot.slane %v1750, 5
        %v1757 = vrot.slane %v1751, 5
        %v1758 = vsel %vm1495, %v1756, %v1757
        %v1759 = vrot.slane %v1752, 5
        %v1760 = vsel %vm1495, %v1757, %v1759
        %1761 = vrot.lane.b32.xlu0 %v1758, 123
        %v1762 = vpop.permute.xlu0 %1761
        %1763 = vrot.lane.b32.xlu0 %v1760, 123
        %v1764 = vpop.permute.xlu0 %1763
        %v1767 = vadd.f32 %v1687, %v1762
        %v1768 = vadd.f32 %v1688, %v1764
        %s1769 = sld [smem:[#allocation2 + $0x2a]]
        %s1770 = sld [smem:[#allocation2 + $0x2b]]
        %s1771 = sld [smem:[#allocation2 + $0x2c]]
        %s1772 = sld [smem:[#allocation2 + $0x2d]]
        %s1773 = sld [smem:[#allocation2 + $0x2e]]
        %s1774 = sld [smem:[#allocation2 + $0x2f]]
        %s1775 = sld [smem:[#allocation2 + $0x30]]
        %s1776 = sld [smem:[#allocation2 + $0x5b]]
        %s1777 = sld [smem:[#allocation2 + $0x5c]]
        %s1778 = sld [smem:[#allocation2 + $0x5d]]
        %s1779 = sld [smem:[#allocation2 + $0x5e]]
        %s1780 = sld [smem:[#allocation2 + $0x5f]]
        %s1781 = sld [smem:[#allocation2 + $0x60]]
        %s1782 = sld [smem:[#allocation2 + $0x61]]
        %v1783 = vstv %s1769
        %v1784 = vmul.f32 %v1783, %v156
        %v1785 = vmul.f32 %v1783, %v157
        %v1786 = vmul.f32 %v1783, %v158
        %vm1790 = vcmask 1041408
        %v1791 = vrot.slane %v1784, 6
        %v1792 = vrot.slane %v1785, 6
        %v1793 = vsel %vm1790, %v1791, %v1792
        %v1794 = vrot.slane %v1786, 6
        %v1795 = vsel %vm1790, %v1792, %v1794
        %v1798 = vadd.f32 %v1707, %v1793
        %v1799 = vadd.f32 %v1708, %v1795
        %v1800 = vstv %s1776
        %v1801 = vmul.f32 %v1800, %v159
        %v1802 = vmul.f32 %v1800, %v160
        %v1803 = vmul.f32 %v1800, %v161
        %v1807 = vrot.slane %v1801, 6
        %v1808 = vrot.slane %v1802, 6
        %v1809 = vsel %vm1790, %v1807, %v1808
        %v1810 = vrot.slane %v1803, 6
        %v1811 = vsel %vm1790, %v1808, %v1810
        %v1814 = vadd.f32 %v1727, %v1809
        %v1815 = vadd.f32 %v1728, %v1811
        %v1816 = vstv %s1770
        %v1817 = vmul.f32 %v1816, %v156
        %v1818 = vmul.f32 %v1816, %v157
        %v1819 = vmul.f32 %v1816, %v158
        %v1823 = vrot.slane %v1817, 6
        %v1824 = vrot.slane %v1818, 6
        %v1825 = vsel %vm1790, %v1823, %v1824
        %v1826 = vrot.slane %v1819, 6
        %v1827 = vsel %vm1790, %v1824, %v1826
        %v1830 = vadd.f32 %v1747, %v1825
        %v1831 = vadd.f32 %v1748, %v1827
        %v1832 = vstv %s1777
        %v1833 = vmul.f32 %v1832, %v159
        %v1834 = vmul.f32 %v1832, %v160
        %v1835 = vmul.f32 %v1832, %v161
        %v1839 = vrot.slane %v1833, 6
        %v1840 = vrot.slane %v1834, 6
        %v1841 = vsel %vm1790, %v1839, %v1840
        %v1842 = vrot.slane %v1835, 6
        %v1843 = vsel %vm1790, %v1840, %v1842
        %v1846 = vadd.f32 %v1767, %v1841
        %v1847 = vadd.f32 %v1768, %v1843
        %v1848 = vstv %s1771
        %v1849 = vmul.f32 %v1848, %v156
        %v1850 = vmul.f32 %v1848, %v157
        %v1851 = vmul.f32 %v1848, %v158
        %v1855 = vrot.slane %v1849, 6
        %v1856 = vrot.slane %v1850, 6
        %v1857 = vsel %vm1790, %v1855, %v1856
        %v1858 = vrot.slane %v1851, 6
        %v1859 = vsel %vm1790, %v1856, %v1858
        %1860 = vrot.lane.b32.xlu0 %v1857, 126
        %v1861 = vpop.permute.xlu0 %1860
        %1862 = vrot.lane.b32.xlu0 %v1859, 126
        %v1863 = vpop.permute.xlu0 %1862
        %v1866 = vadd.f32 %v1798, %v1861
        %v1867 = vadd.f32 %v1799, %v1863
        %v1868 = vstv %s1778
        %v1869 = vmul.f32 %v1868, %v159
        %v1870 = vmul.f32 %v1868, %v160
        %v1871 = vmul.f32 %v1868, %v161
        %v1875 = vrot.slane %v1869, 6
        %v1876 = vrot.slane %v1870, 6
        %v1877 = vsel %vm1790, %v1875, %v1876
        %v1878 = vrot.slane %v1871, 6
        %v1879 = vsel %vm1790, %v1876, %v1878
        %1880 = vrot.lane.b32.xlu0 %v1877, 126
        %v1881 = vpop.permute.xlu0 %1880
        %1882 = vrot.lane.b32.xlu0 %v1879, 126
        %v1883 = vpop.permute.xlu0 %1882
        %v1886 = vadd.f32 %v1814, %v1881
        %v1887 = vadd.f32 %v1815, %v1883
        %v1888 = vstv %s1772
        %v1889 = vmul.f32 %v1888, %v156
        %v1890 = vmul.f32 %v1888, %v157
        %v1891 = vmul.f32 %v1888, %v158
        %v1895 = vrot.slane %v1889, 6
        %v1896 = vrot.slane %v1890, 6
        %v1897 = vsel %vm1790, %v1895, %v1896
        %v1898 = vrot.slane %v1891, 6
        %v1899 = vsel %vm1790, %v1896, %v1898
        %1900 = vrot.lane.b32.xlu0 %v1897, 126
        %v1901 = vpop.permute.xlu0 %1900
        %1902 = vrot.lane.b32.xlu0 %v1899, 126
        %v1903 = vpop.permute.xlu0 %1902
        %v1906 = vadd.f32 %v1830, %v1901
        %v1907 = vadd.f32 %v1831, %v1903
        %v1908 = vstv %s1779
        %v1909 = vmul.f32 %v1908, %v159
        %v1910 = vmul.f32 %v1908, %v160
        %v1911 = vmul.f32 %v1908, %v161
        %v1915 = vrot.slane %v1909, 6
        %v1916 = vrot.slane %v1910, 6
        %v1917 = vsel %vm1790, %v1915, %v1916
        %v1918 = vrot.slane %v1911, 6
        %v1919 = vsel %vm1790, %v1916, %v1918
        %1920 = vrot.lane.b32.xlu0 %v1917, 126
        %v1921 = vpop.permute.xlu0 %1920
        %1922 = vrot.lane.b32.xlu0 %v1919, 126
        %v1923 = vpop.permute.xlu0 %1922
        %v1926 = vadd.f32 %v1846, %v1921
        %v1927 = vadd.f32 %v1847, %v1923
        %v1928 = vstv %s1773
        %v1929 = vmul.f32 %v1928, %v156
        %v1930 = vmul.f32 %v1928, %v157
        %v1931 = vmul.f32 %v1928, %v158
        %v1935 = vrot.slane %v1929, 6
        %v1936 = vrot.slane %v1930, 6
        %v1937 = vsel %vm1790, %v1935, %v1936
        %v1938 = vrot.slane %v1931, 6
        %v1939 = vsel %vm1790, %v1936, %v1938
        %1940 = vrot.lane.b32.xlu0 %v1937, 124
        %v1941 = vpop.permute.xlu0 %1940
        %1942 = vrot.lane.b32.xlu0 %v1939, 124
        %v1943 = vpop.permute.xlu0 %1942
        %v1946 = vadd.f32 %v1866, %v1941
        %v1947 = vadd.f32 %v1867, %v1943
        %v1948 = vstv %s1780
        %v1949 = vmul.f32 %v1948, %v159
        %v1950 = vmul.f32 %v1948, %v160
        %v1951 = vmul.f32 %v1948, %v161
        %v1955 = vrot.slane %v1949, 6
        %v1956 = vrot.slane %v1950, 6
        %v1957 = vsel %vm1790, %v1955, %v1956
        %v1958 = vrot.slane %v1951, 6
        %v1959 = vsel %vm1790, %v1956, %v1958
        %1960 = vrot.lane.b32.xlu0 %v1957, 124
        %v1961 = vpop.permute.xlu0 %1960
        %1962 = vrot.lane.b32.xlu0 %v1959, 124
        %v1963 = vpop.permute.xlu0 %1962
        %v1966 = vadd.f32 %v1886, %v1961
        %v1967 = vadd.f32 %v1887, %v1963
        %v1968 = vstv %s1774
        %v1969 = vmul.f32 %v1968, %v156
        %v1970 = vmul.f32 %v1968, %v157
        %v1971 = vmul.f32 %v1968, %v158
        %v1975 = vrot.slane %v1969, 6
        %v1976 = vrot.slane %v1970, 6
        %v1977 = vsel %vm1790, %v1975, %v1976
        %v1978 = vrot.slane %v1971, 6
        %v1979 = vsel %vm1790, %v1976, %v1978
        %1980 = vrot.lane.b32.xlu0 %v1977, 124
        %v1981 = vpop.permute.xlu0 %1980
        %1982 = vrot.lane.b32.xlu0 %v1979, 124
        %v1983 = vpop.permute.xlu0 %1982
        %v1986 = vadd.f32 %v1906, %v1981
        %v1987 = vadd.f32 %v1907, %v1983
        %v1988 = vstv %s1781
        %v1989 = vmul.f32 %v1988, %v159
        %v1990 = vmul.f32 %v1988, %v160
        %v1991 = vmul.f32 %v1988, %v161
        %v1995 = vrot.slane %v1989, 6
        %v1996 = vrot.slane %v1990, 6
        %v1997 = vsel %vm1790, %v1995, %v1996
        %v1998 = vrot.slane %v1991, 6
        %v1999 = vsel %vm1790, %v1996, %v1998
        %2000 = vrot.lane.b32.xlu0 %v1997, 124
        %v2001 = vpop.permute.xlu0 %2000
        %2002 = vrot.lane.b32.xlu0 %v1999, 124
        %v2003 = vpop.permute.xlu0 %2002
        %v2006 = vadd.f32 %v1926, %v2001
        %v2007 = vadd.f32 %v1927, %v2003
        %v2008 = vstv %s1775
        %v2009 = vmul.f32 %v2008, %v156
        %v2010 = vmul.f32 %v2008, %v157
        %v2011 = vmul.f32 %v2008, %v158
        %v2015 = vrot.slane %v2009, 6
        %v2016 = vrot.slane %v2010, 6
        %v2017 = vsel %vm1790, %v2015, %v2016
        %v2018 = vrot.slane %v2011, 6
        %v2019 = vsel %vm1790, %v2016, %v2018
        %2020 = vrot.lane.b32.xlu0 %v2017, 122
        %v2021 = vpop.permute.xlu0 %2020
        %2022 = vrot.lane.b32.xlu0 %v2019, 122
        %v2023 = vpop.permute.xlu0 %2022
        %v2026 = vadd.f32 %v1946, %v2021
        %v2027 = vadd.f32 %v1947, %v2023
        %v2028 = vstv %s1782
        %v2029 = vmul.f32 %v2028, %v159
        %v2030 = vmul.f32 %v2028, %v160
        %v2031 = vmul.f32 %v2028, %v161
        %v2035 = vrot.slane %v2029, 6
        %v2036 = vrot.slane %v2030, 6
        %v2037 = vsel %vm1790, %v2035, %v2036
        %v2038 = vrot.slane %v2031, 6
        %v2039 = vsel %vm1790, %v2036, %v2038
        %2040 = vrot.lane.b32.xlu0 %v2037, 122
        %v2041 = vpop.permute.xlu0 %2040
        %2042 = vrot.lane.b32.xlu0 %v2039, 122
        %v2043 = vpop.permute.xlu0 %2042
        %v2046 = vadd.f32 %v1966, %v2041
        %v2047 = vadd.f32 %v1967, %v2043
        %v2048 = vadd.f32 %v2026, %v2046
        %v2049 = vadd.f32 %v2027, %v2047
        %v2050 = vadd.f32 %v1986, %v2006
        %v2051 = vadd.f32 %v1987, %v2007
        %2054 = vrot.lane.b32.xlu0 %v2050, 127
        %v2055 = vpop.permute.xlu0 %2054
        %2056 = vrot.lane.b32.xlu0 %v2051, 127
        %v2057 = vpop.permute.xlu0 %2056
        %v2060 = vadd.f32 %v2048, %v2055
        %v2061 = vadd.f32 %v2049, %v2057
        %v2062 = vxor.u32 %v2060, 2147483648
        %v2063 = vxor.u32 %v2061, 2147483648
        %v2064 = vmul.f32 %v2062, 1.442695
        %v2065 = vpow.pop %v2064
        %v2066 = vmul.f32 %v2063, 1.442695
        %v2067 = vpow.pop %v2066
        %v2068 = vadd.f32 %v2065, 1.0
        %v2069 = vadd.f32 %v2067, 1.0
        %v2070 = vrcp.pop %v2068
        %v2071 = vmul.f32 1.0, %v2070
        %v2072 = vrcp.pop %v2069
        %v2073 = vmul.f32 1.0, %v2072
        %vm2074 = vcmask 130048
        %2075 = vst.msk [vmem:[%s150] sm:$0xff] %vm2074, %v2071
        %2076 = vst.msk [vmem:[%s150 + $0x8] sm:$0xff] %vm2074, %v2073
        %s2077 = sand.u32 %s72, 1
        %s2078 = scalar_lea.sflag [#allocation3], %s2077
        %s2079 = sand.u32 %s72, 1
        %s2080 = smul.addr %s2079, 16
        %s2081 = scalar_lea.vmem [#allocation5], %s2080
        // Predicated region
        $region33: #{_spatial_attention_impl.3} parent=27 // pred_check
          %p2082 = pneg %p82
        $region34: #{_spatial_attention_impl.3} parent=27 // pred_check_branch
          %2084 = sbr.rel (%p2082) target = $region36
        $region35: #{_spatial_attention_impl.3} parent=27 // pred_region
          %s2086 = ssub.s32 256, 256
          %2087 = vsyncadd %s2078, %s2086
          %s2088 = smul.addr %s17, 2
          %s2089 = smul.addr %s2088, 128
          %s2090 = scalar_lea.hbm %s2, %s2089
          %s2091 = sshll.u32 %s2081, 4
          %s2092 = int_to_ptr.vmem [resolvable:$true] %s2091
          %2097 = dma.vmem_to_hbm [thread:$0]  %s2092, 256, %s2090, %s2078, 128, 128, 8
        $region36: #{_spatial_attention_impl.3} parent=27 // pred_fallthru
          _
      $region28: #{_spatial_attention_impl.3} parent=5 // pred_fallthru
        _
      %p2098 = scmp.le.s32.totalorder 2, %s12
      // Predicated region
      $region37: #{_spatial_attention_impl.3} parent=5 // pred_check
        %p2099 = pneg %p2098
      $region38: #{_spatial_attention_impl.3} parent=5 // pred_check_branch
        %2101 = sbr.rel (%p2099) target = $region40
      $region39: #{_spatial_attention_impl.3} parent=5 // pred_region
        %s2102 = ssub.s32 %s12, 2
        // Predicated region
        $region41: #{_spatial_attention_impl.3} parent=39 // pred_check
          %p2103 = pneg %p88
        $region42: #{_spatial_attention_impl.3} parent=39 // pred_check_branch
          %2105 = sbr.rel (%p2103) target = $region44
        $region43: #{_spatial_attention_impl.3} parent=39 // pred_region
          %s2106 = sand.u32 %s73, 1
          %s2107 = scalar_lea.sflag [#allocation3], %s2106
          %s2108 = sand.u32 %s73, 1
          %s2109 = smul.addr %s2108, 16
          %s2110 = scalar_lea.vmem [#allocation5], %s2109
          %2111 = dma.done %s2107, 256
        $region44: #{_spatial_attention_impl.3} parent=39 // pred_fallthru
          _
      $region40: #{_spatial_attention_impl.3} parent=5 // pred_fallthru
        _
    $region6: #{_spatial_attention_impl.3} parent=1 // loop_footer
      %s16 = sadd.s32 1, %s12
    $region7: #{_spatial_attention_impl.3} parent=1 // loop_footer_branch
      %11 = sbr.rel target = $region3
    $region8: #{_spatial_attention_impl.3} parent=1 // loop_exit
      _
    %2112 = vsyncpa [#allocation3], 1
    %s2113 = scalar_lea.sflag [#allocation3], 1
    %2114 = vsyncpa %s2113, 1
    %2115 = vsyncpa [#allocation4], 1
    %s2116 = scalar_lea.sflag [#allocation4], 1
    %2117 = vsyncpa %s2116, 1

</llo_original>
